<compile_context>
chip_gen: v6e
topology: v6e:2x2x1
jax: 0.10.0
libtpu: 0.0.40
codegen_flags: <defaults>
</compile_context>

<pallas_src>
import functools

import jax
import jax.numpy as jnp
from jax.experimental import pallas as pl
from jax.experimental.pallas import tpu as pltpu

HIDDEN = 32            # hidden_dim (logical)
D_PAD = 128            # lane-dense padded hidden dim
NUM_LAYERS = 2         # num_layers (must be >= 2)
NUM_NODETYPES = 8      # synthetic (real OGB-code2 value is much larger)
NUM_NODEATTRIBUTES = 16
MAX_DEPTH = 20
BN_EPS = 1e-5

# Adjacency tile sizes (sweep; 512 is also reasonable on v5e/v6e's 128 MiB VMEM).
TILE_M = 256           # output-row tile (sublane dim, multiple of 8)
TILE_K = 256           # reduction tile  (lane dim, multiple of 128)


# ----------------------------- Pallas kernel ------------------------------- #

def _gnn_fused_kernel(ope_ref,                 # SMEM (L,)  : 1 + eps per layer
                      adj_ref,                 # VMEM (TM, TK) bf16 adjacency tile
                      h0_hbm,                  # ANY/HBM (Np, D_PAD) encoded features
                      w1_ref, b1_ref,          # VMEM (L, D_PAD, D_PAD), (L, 1, D_PAD)
                      w2_ref, b2_ref,          # VMEM (L, D_PAD, D_PAD), (L, 1, D_PAD)
                      out_ref,                 # VMEM (TM, D_PAD) output row tile
                      h_scr,                   # VMEM (2, Np, D_PAD) ping-pong h
                      acc_ref,                 # VMEM (TM, D_PAD) f32 accumulator
                      dma_sem,                 # DMA semaphore
                      *, num_layers, tm, tk):
    """Per layer (grid axis 0, outermost):
         new_x = adj @ relu(h)                 (copy_u -> relu edge -> sum, tiled over k)
         z     = (1 + eps) * h + new_x
         h1    = relu(z @ W1' + b1')           (Linear with BN1 pre-folded, then ReLU)
         h2    = h1 @ W2' + b2'                (Linear with outer BN2 pre-folded)
         next h = relu(h2); final output = h2  (dropout = identity, eval mode)
    """
    layer = pl.program_id(0)   # layer index      ('arbitrary', sequential dependency)
    i = pl.program_id(1)       # output row tile
    k = pl.program_id(2)       # reduction tile   (innermost)
    nk = pl.num_programs(2)

    # One-time: DMA the encoded node features from HBM into ping-pong slot 0.
    @pl.when((layer == 0) & (i == 0) & (k == 0))
    def _():
        cp = pltpu.make_async_copy(h0_hbm, h_scr.at[0], dma_sem)
        cp.start()
        cp.wait()

    @pl.when(k == 0)
    def _():
        acc_ref[...] = jnp.zeros_like(acc_ref)

    src = layer % 2            # previous layer's h
    dst = 1 - src              # this layer's h

    # Aggregation: new_x[i-tile] += adj[i-tile, k-tile] @ relu(h_prev[k-tile]).
    k_start = pl.multiple_of(k * tk, tk)
    msg = jnp.maximum(h_scr[src, pl.ds(k_start, tk), :], 0.0).astype(jnp.bfloat16)
    acc_ref[...] += jnp.dot(adj_ref[...], msg, preferred_element_type=jnp.float32)

    @pl.when(k == nk - 1)
    def _():
        i_start = pl.multiple_of(i * tm, tm)
        h_self = h_scr[src, pl.ds(i_start, tm), :]
        z = ope_ref[layer] * h_self + acc_ref[...]                  # (1+eps)*h + new_x
        h1 = jnp.maximum(
            jnp.dot(z, w1_ref[layer], preferred_element_type=jnp.float32)
            + b1_ref[layer], 0.0)
        h2 = (jnp.dot(h1, w2_ref[layer], preferred_element_type=jnp.float32)
              + b2_ref[layer])
        # Input to the next layer is relu(h2) (unused after the last layer).
        h_scr[dst, pl.ds(i_start, tm), :] = jnp.maximum(h2, 0.0)
        # Final node representation has NO relu.  Earlier layers also write this
        # buffer, but the last layer's writeback (layer axis is outermost) wins.
        out_ref[...] = h2


def gnn_fused(adj_p, h0_p, one_plus_eps, w1, b1, w2, b2):
    n_pad = adj_p.shape[0]
    ni, nk = n_pad // TILE_M, n_pad // TILE_K
    kernel = functools.partial(_gnn_fused_kernel,
                               num_layers=NUM_LAYERS, tm=TILE_M, tk=TILE_K)

    vmem_spec = pl.BlockSpec(memory_space=pltpu.MemorySpace.VMEM)
    smem_spec = pl.BlockSpec(memory_space=pltpu.MemorySpace.SMEM)
    hbm_spec = pl.BlockSpec(memory_space=pl.ANY)

    # VMEM budget: double-buffered adj tiles + ping-pong h scratch + accumulator
    # + double-buffered out tile + stacked (BN-folded) weights.
    weight_bytes = sum(int(a.size) * a.dtype.itemsize for a in (w1, b1, w2, b2))
    vmem_bytes = (2 * TILE_M * TILE_K * adj_p.dtype.itemsize
                  + 2 * n_pad * D_PAD * 4
                  + TILE_M * D_PAD * 4
                  + 2 * TILE_M * D_PAD * 4
                  + weight_bytes)
    # Raise the scoped-VMEM limit (default 16/32 MiB) but stay under v7x's 64 MiB.
    vmem_limit = max(32 << 20, min(int(vmem_bytes * 1.5) + (4 << 20), 64 << 20))

    flops = NUM_LAYERS * (2 * n_pad * n_pad * D_PAD + 4 * n_pad * D_PAD * D_PAD)
    bytes_accessed = (NUM_LAYERS * n_pad * n_pad * adj_p.dtype.itemsize
                      + 2 * n_pad * D_PAD * 4 + weight_bytes)

    return pl.pallas_call(
        kernel,
        out_shape=jax.ShapeDtypeStruct((n_pad, D_PAD), jnp.float32),
        grid=(NUM_LAYERS, ni, nk),
        in_specs=[smem_spec,                                              # (1 + eps)
                  pl.BlockSpec((TILE_M, TILE_K), lambda l, i, k: (i, k)),  # adj tile
                  hbm_spec,                                                # h0 (HBM)
                  vmem_spec, vmem_spec, vmem_spec, vmem_spec],             # weights
        out_specs=pl.BlockSpec((TILE_M, D_PAD), lambda l, i, k: (i, 0)),
        scratch_shapes=[pltpu.VMEM((2, n_pad, D_PAD), jnp.float32),  # ping-pong h
                        pltpu.VMEM((TILE_M, D_PAD), jnp.float32),    # aggregation acc
                        pltpu.SemaphoreType.DMA],
        compiler_params=pltpu.CompilerParams(
            dimension_semantics=("arbitrary", "arbitrary", "arbitrary"),
            vmem_limit_bytes=vmem_limit),
        cost_estimate=pl.CostEstimate(flops=flops, transcendentals=0,
                                      bytes_accessed=bytes_accessed),
    )(one_plus_eps, adj_p, h0_p, w1, b1, w2, b2)


# ------------------------------ Parameters --------------------------------- #

def _linear_init(key, fan_in, fan_out):
    """PyTorch nn.Linear default init; weight returned as [in, out] so kernel does x @ W."""
    kw, kb = jax.random.split(key)
    bound = 1.0 / jnp.sqrt(fan_in)
    w_t = jax.random.uniform(kw, (fan_in, fan_out), jnp.float32, -bound, bound)
    b = jax.random.uniform(kb, (1, fan_out), jnp.float32, -bound, bound)
    return w_t, b


def _bn_eval_scale_shift(d):
    """Freshly-initialized BatchNorm1d eval params: gamma=1, beta=0, mean=0, var=1."""
    gamma = jnp.ones((1, d), jnp.float32)
    beta = jnp.zeros((1, d), jnp.float32)
    mean = jnp.zeros((1, d), jnp.float32)
    var = jnp.ones((1, d), jnp.float32)
    scale = gamma / jnp.sqrt(var + BN_EPS)
    shift = beta - mean * scale
    return scale, shift


def _pad_w(w):
    return jnp.pad(w, ((0, D_PAD - w.shape[0]), (0, D_PAD - w.shape[1])))


def _pad_b(b):
    return jnp.pad(b, ((0, 0), (0, D_PAD - b.shape[1])))


def _pad_emb(e):
    return jnp.pad(e, ((0, 0), (0, D_PAD - e.shape[1])))


def init_params(key, hidden_dim, num_layers):
    keys = jax.random.split(key, 3 + 2 * num_layers)
    params = {
        # ASTNodeEncoder embeddings (nn.Embedding default: N(0,1)), padded to D_PAD.
        "type_emb": _pad_emb(jax.random.normal(keys[0], (NUM_NODETYPES, hidden_dim), jnp.float32)),
        "attr_emb": _pad_emb(jax.random.normal(keys[1], (NUM_NODEATTRIBUTES, hidden_dim), jnp.float32)),
        "depth_emb": _pad_emb(jax.random.normal(keys[2], (MAX_DEPTH + 1, hidden_dim), jnp.float32)),
    }

    w1_l, b1_l, w2_l, b2_l, ope_l = [], [], [], [], []
    for layer in range(num_layers):
        k1, k2 = keys[3 + 2 * layer], keys[4 + 2 * layer]
        w1, b1 = _linear_init(k1, hidden_dim, hidden_dim)
        w2, b2 = _linear_init(k2, hidden_dim, hidden_dim)
        bn1_scale, bn1_shift = _bn_eval_scale_shift(hidden_dim)   # BN inside GIN mlp
        bn2_scale, bn2_shift = _bn_eval_scale_shift(hidden_dim)   # outer GNNCode_node BN
        # Fold eval-mode BN into adjacent Linear: (x@W + b)*s + t == x@(W*s) + (b*s + t)
        w1f = w1 * bn1_scale
        b1f = b1 * bn1_scale + bn1_shift
        w2f = w2 * bn2_scale
        b2f = b2 * bn2_scale + bn2_shift
        w1_l.append(_pad_w(w1f))
        b1_l.append(_pad_b(b1f))
        w2_l.append(_pad_w(w2f))
        b2_l.append(_pad_b(b2f))
        ope_l.append(1.0 + 0.0)                                   # GIN eps param = 0

    params["w1"] = jnp.stack(w1_l)                                # [L, D_PAD, D_PAD]
    params["b1"] = jnp.stack(b1_l)                                # [L, 1, D_PAD]
    params["w2"] = jnp.stack(w2_l)                                # [L, D_PAD, D_PAD]
    params["b2"] = jnp.stack(b2_l)                                # [L, 1, D_PAD]
    params["one_plus_eps"] = jnp.asarray(ope_l, jnp.float32)      # [L] (SMEM)
    return params


# ------------------------------- Forward ------------------------------------ #

def gnn_code_node_forward(adj, x_feat, depth, params):
    """x_feat: [N, 2] int32 (node type id, node attribute id); depth: [N] int32.
       adj: [N, N] float32 dense adjacency (adj[v, u] = 1.0 iff edge u -> v)."""
    n = adj.shape[0]

    # ASTNodeEncoder (embedding gathers, lane-dense padded layout).
    depth_c = jnp.minimum(depth, MAX_DEPTH)
    h0 = (params["type_emb"][x_feat[:, 0]]
          + params["attr_emb"][x_feat[:, 1]]
          + params["depth_emb"][depth_c]).astype(jnp.float32)     # [N, D_PAD]

    # Pad node count to a multiple of the row tile; padded adjacency rows/cols are
    # zero so padded nodes never influence real nodes (their values are discarded).
    n_pad = ((n + TILE_M - 1) // TILE_M) * TILE_M
    if n_pad != n:
        h0 = jnp.pad(h0, ((0, n_pad - n), (0, 0)))
        adj = jnp.pad(adj, ((0, n_pad - n), (0, n_pad - n)))
    adj_bf16 = adj.astype(jnp.bfloat16)   # 0/1 entries are exact in bf16

    out = gnn_fused(adj_bf16, h0, params["one_plus_eps"],
                    params["w1"], params["b1"], params["w2"], params["b2"])
    return out[:n, :HIDDEN]


# --------------------------------- Main ------------------------------------- #

if __name__ == "__main__":
    key = jax.random.PRNGKey(0)
    k_param, k_adj, k_type, k_attr, k_depth = jax.random.split(key, 5)

    N = 16  # number of graph nodes
    params = init_params(k_param, HIDDEN, NUM_LAYERS)

    # Synthetic graph: random directed edges (dense adjacency, dest-major rows).
    adj = (jax.random.uniform(k_adj, (N, N)) < 0.25).astype(jnp.float32)
    x_feat = jnp.stack(
        [jax.random.randint(k_type, (N,), 0, NUM_NODETYPES),
         jax.random.randint(k_attr, (N,), 0, NUM_NODEATTRIBUTES)], axis=1
    ).astype(jnp.int32)
    depth = jax.random.randint(k_depth, (N,), 0, MAX_DEPTH + 5).astype(jnp.int32)

    out = gnn_code_node_forward(adj, x_feat, depth, params)
    jax.block_until_ready(out)
    assert out.shape == (N, HIDDEN) and out.dtype == jnp.float32
    print("KERNEL_OK")
</pallas_src>

<mosaic_0001>
module attributes {stable_mosaic.version = 11 : i64} {
  func.func @_gnn_fused_kernel(%arg0: i32, %arg1: i32, %arg2: i32, %arg3: memref<2xf32, #tpu.memory_space<smem>>, %arg4: memref<256x256xbf16, #tpu.memory_space<vmem>>, %arg5: memref<256x128xf32, #tpu.memory_space<any>>, %arg6: memref<2x128x128xf32, #tpu.memory_space<vmem>>, %arg7: memref<2x1x128xf32, #tpu.memory_space<vmem>>, %arg8: memref<2x128x128xf32, #tpu.memory_space<vmem>>, %arg9: memref<2x1x128xf32, #tpu.memory_space<vmem>>, %arg10: memref<256x128xf32, #tpu.memory_space<vmem>>, %arg11: memref<2x256x128xf32, #tpu.memory_space<vmem>>, %arg12: memref<256x128xf32, #tpu.memory_space<vmem>>, %arg13: memref<!tpu.dma_semaphore, #tpu.memory_space<semaphore_mem>>) attributes {dimension_semantics = [#tpu.dimension_semantics<arbitrary>, #tpu.dimension_semantics<arbitrary>, #tpu.dimension_semantics<arbitrary>], iteration_bounds = array<i64: 2, 1, 1>, scalar_prefetch = 0 : i64, scratch_operands = 3 : i64, tpu.core_type = #tpu.core_type<tc>, window_params = [{transform_indices = @transform_0, window_bounds = array<i64: 2>}, {transform_indices = @transform_1, window_bounds = array<i64: 256, 256>}, {}, {pipeline_mode = #tpu.pipeline_mode<synchronous>, transform_indices = @transform_3, window_bounds = array<i64: 2, 128, 128>}, {pipeline_mode = #tpu.pipeline_mode<synchronous>, transform_indices = @transform_4, window_bounds = array<i64: 2, 1, 128>}, {pipeline_mode = #tpu.pipeline_mode<synchronous>, transform_indices = @transform_5, window_bounds = array<i64: 2, 128, 128>}, {pipeline_mode = #tpu.pipeline_mode<synchronous>, transform_indices = @transform_6, window_bounds = array<i64: 2, 1, 128>}, {transform_indices = @transform_7, window_bounds = array<i64: 256, 128>}]} {
    %c0_i32 = arith.constant 0 : i32
    %0 = arith.cmpi eq, %arg0, %c0_i32 : i32
    %c0_i32_0 = arith.constant 0 : i32
    %1 = arith.cmpi eq, %arg1, %c0_i32_0 : i32
    %2 = arith.andi %0, %1 : i1
    %c0_i32_1 = arith.constant 0 : i32
    %3 = arith.cmpi eq, %arg2, %c0_i32_1 : i32
    %4 = arith.andi %2, %3 : i1
    %5 = arith.extui %4 : i1 to i32
    %c0_i32_2 = arith.constant 0 : i32
    %6 = arith.cmpi ne, %5, %c0_i32_2 : i32
    scf.if %6 {
      %c0_i32_19 = arith.constant 0 : i32
      %c0_i32_20 = arith.constant 0 : i32
      %c0_i32_21 = arith.constant 0 : i32
      %38 = tpu.memref_slice %arg11[%c0_i32_19, %c0_i32_20, %c0_i32_21] : memref<2x256x128xf32, #tpu.memory_space<vmem>> -> memref<1x256x128xf32, #tpu.memory_space<vmem>>
      %39 = tpu.memref_squeeze %38 : memref<1x256x128xf32, #tpu.memory_space<vmem>> -> memref<256x128xf32, #tpu.memory_space<vmem>>
      tpu.enqueue_dma source(%arg5 : memref<256x128xf32, #tpu.memory_space<any>>) target(%39 : memref<256x128xf32, #tpu.memory_space<vmem>>) target_semaphore(%arg13 : memref<!tpu.dma_semaphore, #tpu.memory_space<semaphore_mem>>)
      %c0_i32_22 = arith.constant 0 : i32
      %c0_i32_23 = arith.constant 0 : i32
      %c0_i32_24 = arith.constant 0 : i32
      %40 = tpu.memref_slice %arg11[%c0_i32_22, %c0_i32_23, %c0_i32_24] : memref<2x256x128xf32, #tpu.memory_space<vmem>> -> memref<1x256x128xf32, #tpu.memory_space<vmem>>
      %41 = tpu.memref_squeeze %40 : memref<1x256x128xf32, #tpu.memory_space<vmem>> -> memref<256x128xf32, #tpu.memory_space<vmem>>
      tpu.wait_dma2 semaphore(%arg13 : memref<!tpu.dma_semaphore, #tpu.memory_space<semaphore_mem>>) src(%arg5 : memref<256x128xf32, #tpu.memory_space<any>>) dst(%41 : memref<256x128xf32, #tpu.memory_space<vmem>>)
    } else {
    }
    %c0_i32_3 = arith.constant 0 : i32
    %7 = arith.cmpi eq, %arg2, %c0_i32_3 : i32
    %8 = arith.extui %7 : i1 to i32
    %c0_i32_4 = arith.constant 0 : i32
    %9 = arith.cmpi ne, %8, %c0_i32_4 : i32
    scf.if %9 {
      %cst_19 = arith.constant 0.000000e+00 : f32
      %38 = vector.broadcast %cst_19 : f32 to vector<256x128xf32>
      %c0_20 = arith.constant 0 : index
      %c0_21 = arith.constant 0 : index
      %39 = vector.load %arg12[%c0_20, %c0_21] : memref<256x128xf32, #tpu.memory_space<vmem>>, vector<256x128xf32>
      tpu.vector_store %arg12[%c0_20, %c0_21], %38 {strides = array<i32>} : memref<256x128xf32, #tpu.memory_space<vmem>>, vector<256x128xf32>,
    } else {
    }
    %c2_i32 = arith.constant 2 : i32
    %c0_i32_5 = arith.constant 0 : i32
    %10 = arith.cmpi eq, %c2_i32, %c0_i32_5 : i32
    %c1_i32 = arith.constant 1 : i32
    %11 = arith.select %10, %c1_i32, %c2_i32 : i32
    %12 = arith.remsi %arg0, %11 : i32
    %c0_i32_6 = arith.constant 0 : i32
    %13 = arith.cmpi ne, %12, %c0_i32_6 : i32
    %c0_i32_7 = arith.constant 0 : i32
    %14 = arith.cmpi slt, %12, %c0_i32_7 : i32
    %c0_i32_8 = arith.constant 0 : i32
    %15 = arith.cmpi slt, %11, %c0_i32_8 : i32
    %16 = arith.xori %14, %15 : i1
    %17 = arith.andi %16, %13 : i1
    %18 = arith.addi %12, %11 : i32
    %19 = arith.select %17, %18, %12 : i32
    %c1_i32_9 = arith.constant 1 : i32
    %20 = arith.subi %c1_i32_9, %19 : i32
    %c256_i32 = arith.constant 256 : i32
    %21 = arith.muli %arg2, %c256_i32 : i32
    %22 = tpu.assume_multiple %21, 256 : i32
    %23 = arith.index_cast %19 : i32 to index
    %24 = arith.index_cast %22 : i32 to index
    %c0 = arith.constant 0 : index
    %25 = vector.load %arg11[%23, %24, %c0] : memref<2x256x128xf32, #tpu.memory_space<vmem>>, vector<1x256x128xf32>
    %26 = vector.shape_cast %25 : vector<1x256x128xf32> to vector<256x128xf32>
    %cst = arith.constant 0.000000e+00 : f32
    %27 = vector.broadcast %cst : f32 to vector<256x128xf32>
    %28 = arith.maximumf %26, %27 : vector<256x128xf32>
    %29 = arith.truncf %28 : vector<256x128xf32> to vector<256x128xbf16>
    %c0_10 = arith.constant 0 : index
    %c0_11 = arith.constant 0 : index
    %30 = vector.load %arg12[%c0_10, %c0_11] : memref<256x128xf32, #tpu.memory_space<vmem>>, vector<256x128xf32>
    %c0_12 = arith.constant 0 : index
    %c0_13 = arith.constant 0 : index
    %31 = vector.load %arg4[%c0_12, %c0_13] : memref<256x256xbf16, #tpu.memory_space<vmem>>, vector<256x256xbf16>
    %cst_14 = arith.constant dense<0.000000e+00> : vector<256x128xf32>
    %32 = tpu.matmul %31, %29, %cst_14 {dimension_numbers = #tpu.dot_dimension_numbers<[1], [0], [0], [1], [0, 0, 1, 1], [], []>} : vector<256x256xbf16>, vector<256x128xbf16>, vector<256x128xf32> -> vector<256x128xf32>
    %33 = arith.addf %30, %32 : vector<256x128xf32>
    %c0_15 = arith.constant 0 : index
    %c0_16 = arith.constant 0 : index
    %34 = vector.load %arg12[%c0_15, %c0_16] : memref<256x128xf32, #tpu.memory_space<vmem>>, vector<256x128xf32>
    tpu.vector_store %arg12[%c0_15, %c0_16], %33 {strides = array<i32>} : memref<256x128xf32, #tpu.memory_space<vmem>>, vector<256x128xf32>,
    %c0_i32_17 = arith.constant 0 : i32
    %35 = arith.cmpi eq, %arg2, %c0_i32_17 : i32
    %36 = arith.extui %35 : i1 to i32
    %c0_i32_18 = arith.constant 0 : i32
    %37 = arith.cmpi ne, %36, %c0_i32_18 : i32
    scf.if %37 {
      %c256_i32_19 = arith.constant 256 : i32
      %38 = arith.muli %arg1, %c256_i32_19 : i32
      %39 = tpu.assume_multiple %38, 256 : i32
      %40 = arith.index_cast %19 : i32 to index
      %41 = arith.index_cast %39 : i32 to index
      %c0_20 = arith.constant 0 : index
      %42 = vector.load %arg11[%40, %41, %c0_20] : memref<2x256x128xf32, #tpu.memory_space<vmem>>, vector<1x256x128xf32>
      %43 = vector.shape_cast %42 : vector<1x256x128xf32> to vector<256x128xf32>
      %44 = arith.index_cast %arg0 : i32 to index
      %45 = memref.load %arg3[%44] : memref<2xf32, #tpu.memory_space<smem>>
      %46 = vector.broadcast %45 : f32 to vector<256x128xf32>
      %47 = arith.mulf %46, %43 : vector<256x128xf32>
      %c0_21 = arith.constant 0 : index
      %c0_22 = arith.constant 0 : index
      %48 = vector.load %arg12[%c0_21, %c0_22] : memref<256x128xf32, #tpu.memory_space<vmem>>, vector<256x128xf32>
      %49 = arith.addf %47, %48 : vector<256x128xf32>
      %50 = arith.index_cast %arg0 : i32 to index
      %c0_23 = arith.constant 0 : index
      %c0_24 = arith.constant 0 : index
      %51 = vector.load %arg6[%50, %c0_23, %c0_24] : memref<2x128x128xf32, #tpu.memory_space<vmem>>, vector<1x128x128xf32>
      %52 = vector.shape_cast %51 : vector<1x128x128xf32> to vector<128x128xf32>
      %cst_25 = arith.constant dense<0.000000e+00> : vector<256x128xf32>
      %53 = tpu.matmul %49, %52, %cst_25 {dimension_numbers = #tpu.dot_dimension_numbers<[1], [0], [0], [1], [0, 0, 1, 1], [], []>} : vector<256x128xf32>, vector<128x128xf32>, vector<256x128xf32> -> vector<256x128xf32>
      %54 = arith.index_cast %arg0 : i32 to index
      %c0_26 = arith.constant 0 : index
      %c0_27 = arith.constant 0 : index
      %55 = vector.load %arg7[%54, %c0_26, %c0_27] : memref<2x1x128xf32, #tpu.memory_space<vmem>>, vector<1x1x128xf32>
      %56 = vector.shape_cast %55 : vector<1x1x128xf32> to vector<1x128xf32>
      %57 = vector.broadcast %56 : vector<1x128xf32> to vector<256x128xf32>
      %58 = arith.addf %53, %57 : vector<256x128xf32>
      %cst_28 = arith.constant 0.000000e+00 : f32
      %59 = vector.broadcast %cst_28 : f32 to vector<256x128xf32>
      %60 = arith.maximumf %58, %59 : vector<256x128xf32>
      %61 = arith.index_cast %arg0 : i32 to index
      %c0_29 = arith.constant 0 : index
      %c0_30 = arith.constant 0 : index
      %62 = vector.load %arg8[%61, %c0_29, %c0_30] : memref<2x128x128xf32, #tpu.memory_space<vmem>>, vector<1x128x128xf32>
      %63 = vector.shape_cast %62 : vector<1x128x128xf32> to vector<128x128xf32>
      %cst_31 = arith.constant dense<0.000000e+00> : vector<256x128xf32>
      %64 = tpu.matmul %60, %63, %cst_31 {dimension_numbers = #tpu.dot_dimension_numbers<[1], [0], [0], [1], [0, 0, 1, 1], [], []>} : vector<256x128xf32>, vector<128x128xf32>, vector<256x128xf32> -> vector<256x128xf32>
      %65 = arith.index_cast %arg0 : i32 to index
      %c0_32 = arith.constant 0 : index
      %c0_33 = arith.constant 0 : index
      %66 = vector.load %arg9[%65, %c0_32, %c0_33] : memref<2x1x128xf32, #tpu.memory_space<vmem>>, vector<1x1x128xf32>
      %67 = vector.shape_cast %66 : vector<1x1x128xf32> to vector<1x128xf32>
      %68 = vector.broadcast %67 : vector<1x128xf32> to vector<256x128xf32>
      %69 = arith.addf %64, %68 : vector<256x128xf32>
      %cst_34 = arith.constant 0.000000e+00 : f32
      %70 = vector.broadcast %cst_34 : f32 to vector<256x128xf32>
      %71 = arith.maximumf %69, %70 : vector<256x128xf32>
      %72 = arith.index_cast %20 : i32 to index
      %73 = arith.index_cast %39 : i32 to index
      %c0_35 = arith.constant 0 : index
      %74 = vector.load %arg11[%72, %73, %c0_35] : memref<2x256x128xf32, #tpu.memory_space<vmem>>, vector<1x256x128xf32>
      %75 = vector.shape_cast %74 : vector<1x256x128xf32> to vector<256x128xf32>
      %76 = vector.shape_cast %71 : vector<256x128xf32> to vector<1x256x128xf32>
      tpu.vector_store %arg11[%72, %73, %c0_35], %76 {strides = array<i32>} : memref<2x256x128xf32, #tpu.memory_space<vmem>>, vector<1x256x128xf32>,
      %c0_36 = arith.constant 0 : index
      %c0_37 = arith.constant 0 : index
      %77 = vector.load %arg10[%c0_36, %c0_37] : memref<256x128xf32, #tpu.memory_space<vmem>>, vector<256x128xf32>
      tpu.vector_store %arg10[%c0_36, %c0_37], %69 {strides = array<i32>} : memref<256x128xf32, #tpu.memory_space<vmem>>, vector<256x128xf32>,
    } else {
    }
    return
  }
  func.func @transform_0(%arg0: i32, %arg1: i32, %arg2: i32) -> i32 {
    %c0_i32 = arith.constant 0 : i32
    %c0_i32_0 = arith.constant 0 : i32
    return %c0_i32 : i32
  }
  func.func @transform_1(%arg0: i32, %arg1: i32, %arg2: i32) -> (i32, i32) {
    %c0_i32 = arith.constant 0 : i32
    return %arg1, %arg2 : i32, i32
  }
  func.func @transform_3(%arg0: i32, %arg1: i32, %arg2: i32) -> (i32, i32, i32) {
    %c0_i32 = arith.constant 0 : i32
    %c0_i32_0 = arith.constant 0 : i32
    %c0_i32_1 = arith.constant 0 : i32
    %c0_i32_2 = arith.constant 0 : i32
    return %c0_i32, %c0_i32_0, %c0_i32_1 : i32, i32, i32
  }
  func.func @transform_4(%arg0: i32, %arg1: i32, %arg2: i32) -> (i32, i32, i32) {
    %c0_i32 = arith.constant 0 : i32
    %c0_i32_0 = arith.constant 0 : i32
    %c0_i32_1 = arith.constant 0 : i32
    %c0_i32_2 = arith.constant 0 : i32
    return %c0_i32, %c0_i32_0, %c0_i32_1 : i32, i32, i32
  }
  func.func @transform_5(%arg0: i32, %arg1: i32, %arg2: i32) -> (i32, i32, i32) {
    %c0_i32 = arith.constant 0 : i32
    %c0_i32_0 = arith.constant 0 : i32
    %c0_i32_1 = arith.constant 0 : i32
    %c0_i32_2 = arith.constant 0 : i32
    return %c0_i32, %c0_i32_0, %c0_i32_1 : i32, i32, i32
  }
  func.func @transform_6(%arg0: i32, %arg1: i32, %arg2: i32) -> (i32, i32, i32) {
    %c0_i32 = arith.constant 0 : i32
    %c0_i32_0 = arith.constant 0 : i32
    %c0_i32_1 = arith.constant 0 : i32
    %c0_i32_2 = arith.constant 0 : i32
    return %c0_i32, %c0_i32_0, %c0_i32_1 : i32, i32, i32
  }
  func.func @transform_7(%arg0: i32, %arg1: i32, %arg2: i32) -> (i32, i32) {
    %c0_i32 = arith.constant 0 : i32
    %c0_i32_0 = arith.constant 0 : i32
    return %arg1, %c0_i32 : i32, i32
  }
}

</mosaic_0001>

<llo_original>
// kernel: tpu_custom_call.1
$region0: #{tpu_custom_call.1}
  #allocation0 [shape = 'u32[]', space=smem, size = 0x4, offset = 0x4, fixed_abs, tag = 'smem constant byte address 0x4 - core index']
  #allocation1 [shape = 'u32[144,128]{1,0:T(1,128)}', space=vmem, size = 0x12000, scoped, tag = 'internal scratch']
  #allocation2 [shape = 'f32[2,256,128]{2,1,0:T(8,128)}', space=vmem, size = 0x40000, scoped, tag = 'scratch operand']
  #allocation3 [shape = 'f32[256,128]{1,0:T(8,128)}', space=vmem, size = 0x20000, scoped, tag = 'scratch operand']
  #allocation4 [shape = 's32[1]{0}', space=sflag, size = 0x4, scoped, tag = 'scratch operand']
  #allocation14 [shape = 's32[]', space=sflag, size = 0x4, offset = 0, fixed_abs, tag = 'sflag constant byte address 0x0 - dummy sync flag']
  #allocation15 [shape = 's32[]', space=sflag, size = 0x4, offset = 0, fixed_abs, tag = 'sflag constant byte address 0x0 - dummy sync flag']
  #allocation16 [shape = 'u32[]', space=smem, size = 0x4, offset = 0x44, fixed_abs, tag = 'smem constant byte address 0x44 - assertion arg 0']
  #allocation17 [shape = 'u32[]', space=smem, size = 0x4, offset = 0x48, fixed_abs, tag = 'smem constant byte address 0x48 - assertion arg 1']
  %s0 = inlined_call_operand.hbm [shape: f32[2], index: 0, kind: input, shape index: {}]
  %s1 = inlined_call_operand.hbm [shape: bf16[256,256], index: 1, kind: input, shape index: {}]
  %s2 = inlined_call_operand.hbm [shape: f32[256,128], index: 2, kind: input, shape index: {}]
  %s3 = inlined_call_operand.hbm [shape: f32[2,128,128], index: 3, kind: input, shape index: {}]
  %s4 = inlined_call_operand.vmem [shape: f32[2,1,128], index: 4, kind: input, shape index: {}]
  %s5 = inlined_call_operand.hbm [shape: f32[2,128,128], index: 5, kind: input, shape index: {}]
  %s6 = inlined_call_operand.vmem [shape: f32[2,1,128], index: 6, kind: input, shape index: {}]
  %s7 = inlined_call_operand.hbm [shape: f32[256,128], index: 7, kind: output, shape index: {}]
  %s8 = sld [smem:[#allocation0]]
  $region89: #{tpu_custom_call.1} parent=0
    _
  %s10 = ssub.s32 1, %s8
  %s11 = scalar_select 0, %s10, %s8
  $region1: #{tpu_custom_call.1} parent=0
    #allocation5 [shape = 'u8[512]{0}', space=smem, size = 0x200, scoped, tag = 'input window, operand 0, single buffered']
    #allocation6 [shape = 's32[2]{0}', space=sflag, size = 0x8, scoped, tag = 'scoped memory for tpu_custom_call.1']
    #allocation7 [shape = 's32[2]{0}', space=sflag, size = 0x8, scoped, tag = 'scoped memory for tpu_custom_call.1']
    #allocation8 [shape = 's32[2]{0}', space=sflag, size = 0x8, scoped, tag = 'scoped memory for tpu_custom_call.1']
    #allocation9 [shape = 'u8[131072]{0}', space=vmem, size = 0x20000, scoped, tag = 'input window, operand 1, single buffered']
    #allocation10 [shape = 'u8[131072]{0}', space=vmem, size = 0x20000, scoped, tag = 'input window, operand 3, single buffered']
    #allocation11 [shape = 's32[1]{0}', space=sflag, size = 0x4, scoped, tag = 'scoped memory for tpu_custom_call.1']
    #allocation12 [shape = 'u8[131072]{0}', space=vmem, size = 0x20000, scoped, tag = 'input window, operand 5, single buffered']
    #allocation13 [shape = 'u8[131072]{0}', space=vmem, size = 0x20000, scoped, tag = 'output window, operand 0, single buffered']
    %12 = vsyncpa [#allocation8], 0
    %13 = vsyncpa [#allocation6], 0
    %14 = vsyncpa [#allocation11], 0
    %15 = vsyncpa [#allocation7], 0
    loop: start=0, step=1, limit=4
    $region2: #{tpu_custom_call.1} parent=1 // loop_pre_header
      _
    $region3: #{tpu_custom_call.1} parent=1 // loop_header
      %s17 = sphi 0, %s21
      %p18 = scmp.ge.s32.totalorder %s17, 4
      %s24 = sphi 0, %s43
      %s25 = sphi 0, %s39
      %s26 = sphi 0, %s35
      %s27 = sphi 0, %s24
      %s28 = sphi 0, %s25
      %s29 = sphi 0, %s26
      %s30 = sphi 0, %s27
      %s31 = sphi 0, %s28
      %s32 = sphi 0, %s29
      %s44 = sphi 0, %s44
      %s46 = sphi 0, %s44
      %s47 = sphi 0, %s46
      %s61 = sphi 0, %s47
      %s69 = sphi 0, %s71
      %s72 = sphi 0, %s69
      %s73 = sphi 0, %s72
      %s89 = sphi 0, %s73
      %s93 = sphi 0, %s93
      %s95 = sphi 0, %s93
      %s96 = sphi 0, %s95
      %s110 = sphi 0, %s96
      %s114 = sphi 0, %s114
      %s116 = sphi 0, %s114
      %s117 = sphi 0, %s116
      %s131 = sphi 0, %s117
      %s135 = sphi 0, %s135
      %s137 = sphi 0, %s135
      %s138 = sphi 0, %s137
      %s152 = sphi 0, %s138
      %s156 = sphi 0, %s156
      %s158 = sphi 0, %s156
      %s159 = sphi 0, %s158
      %s173 = sphi 0, %s159
      %s179 = sphi 0, %s181
      %s182 = sphi 0, %s179
      %s183 = sphi 0, %s182
      %s199 = sphi 0, %s183
    $region4: #{tpu_custom_call.1} parent=1 // loop_header_branch
      %20 = sbr.rel (%p18) target = $region8
    $region5: #{tpu_custom_call.1} parent=1 // loop_body
      %s22 = ssub.s32 %s17, 1
      %s23 = ssub.s32 %s17, 2
      %s33 = sadd.s32 1, %s26
      %p34 = scmp.ge.s32.totalorder %s33, 1
      %s35 = scalar_select %p34, 0, %s33
      %s36 = sadd.s32 1, %s25
      %s37 = scalar_select %p34, %s36, %s25
      %p38 = scmp.ge.s32.totalorder %s37, 1
      %s39 = scalar_select %p38, 0, %s37
      %s40 = sadd.s32 1, %s24
      %s41 = scalar_select %p38, %s40, %s24
      %p42 = scmp.ge.s32.totalorder %s41, 2
      %s43 = scalar_select %p42, 0, %s41
      %s45 = sadd.s32 %s44, 1
      %p48 = scmp.eq.s32.totalorder %s17, 1
      %p49 = scmp.ne.s32.totalorder %s44, %s46
      %p50 = scmp.eq.s32.totalorder %s17, 0
      %p51 = por %p49, %p50
      %p52 = scmp.ne.s32.totalorder %s44, %s46
      %p53 = scmp.eq.s32.totalorder %s22, 1
      %p54 = por %p52, %p53
      %p55 = scmp.ne.s32.totalorder %s46, %s47
      %p56 = scmp.eq.s32.totalorder %s22, 0
      %p57 = por %p55, %p56
      %p58 = scmp.ne.s32.totalorder %s46, %s47
      %p59 = scmp.eq.s32.totalorder %s23, 1
      %p60 = por %p58, %p59
      %p62 = scmp.ne.s32.totalorder %s47, %s61
      %p63 = scmp.eq.s32.totalorder %s23, 0
      %p64 = por %p62, %p63
      %s65 = ssub.s32 %s25, %s39
      %s66 = ssub.s32 %s26, %s35
      %s67 = sor.u32 %s65, %s66
      %p68 = scmp.eq.s32.totalorder %s67, 0
      %s70 = sadd.s32 %s69, 1
      %s71 = scalar_select %p68, %s69, %s70
      %p74 = pneg %p68
      %p75 = scmp.eq.s32.totalorder %s17, 1
      %p76 = por %p74, %p75
      %p77 = scmp.ne.s32.totalorder %s69, %s72
      %p78 = scmp.eq.s32.totalorder %s17, 0
      %p79 = por %p77, %p78
      %p80 = scmp.ne.s32.totalorder %s69, %s72
      %p81 = scmp.eq.s32.totalorder %s22, 1
      %p82 = por %p80, %p81
      %p83 = scmp.ne.s32.totalorder %s72, %s73
      %p84 = scmp.eq.s32.totalorder %s22, 0
      %p85 = por %p83, %p84
      %p86 = scmp.ne.s32.totalorder %s72, %s73
      %p87 = scmp.eq.s32.totalorder %s23, 1
      %p88 = por %p86, %p87
      %p90 = scmp.ne.s32.totalorder %s73, %s89
      %p91 = scmp.eq.s32.totalorder %s23, 0
      %p92 = por %p90, %p91
      %s94 = sadd.s32 %s93, 1
      %p97 = scmp.eq.s32.totalorder %s17, 1
      %p98 = scmp.ne.s32.totalorder %s93, %s95
      %p99 = scmp.eq.s32.totalorder %s17, 0
      %p100 = por %p98, %p99
      %p101 = scmp.ne.s32.totalorder %s93, %s95
      %p102 = scmp.eq.s32.totalorder %s22, 1
      %p103 = por %p101, %p102
      %p104 = scmp.ne.s32.totalorder %s95, %s96
      %p105 = scmp.eq.s32.totalorder %s22, 0
      %p106 = por %p104, %p105
      %p107 = scmp.ne.s32.totalorder %s95, %s96
      %p108 = scmp.eq.s32.totalorder %s23, 1
      %p109 = por %p107, %p108
      %p111 = scmp.ne.s32.totalorder %s96, %s110
      %p112 = scmp.eq.s32.totalorder %s23, 0
      %p113 = por %p111, %p112
      %s115 = sadd.s32 %s114, 1
      %p118 = scmp.eq.s32.totalorder %s17, 1
      %p119 = scmp.ne.s32.totalorder %s114, %s116
      %p120 = scmp.eq.s32.totalorder %s17, 0
      %p121 = por %p119, %p120
      %p122 = scmp.ne.s32.totalorder %s114, %s116
      %p123 = scmp.eq.s32.totalorder %s22, 1
      %p124 = por %p122, %p123
      %p125 = scmp.ne.s32.totalorder %s116, %s117
      %p126 = scmp.eq.s32.totalorder %s22, 0
      %p127 = por %p125, %p126
      %p128 = scmp.ne.s32.totalorder %s116, %s117
      %p129 = scmp.eq.s32.totalorder %s23, 1
      %p130 = por %p128, %p129
      %p132 = scmp.ne.s32.totalorder %s117, %s131
      %p133 = scmp.eq.s32.totalorder %s23, 0
      %p134 = por %p132, %p133
      %s136 = sadd.s32 %s135, 1
      %p139 = scmp.eq.s32.totalorder %s17, 1
      %p140 = scmp.ne.s32.totalorder %s135, %s137
      %p141 = scmp.eq.s32.totalorder %s17, 0
      %p142 = por %p140, %p141
      %p143 = scmp.ne.s32.totalorder %s135, %s137
      %p144 = scmp.eq.s32.totalorder %s22, 1
      %p145 = por %p143, %p144
      %p146 = scmp.ne.s32.totalorder %s137, %s138
      %p147 = scmp.eq.s32.totalorder %s22, 0
      %p148 = por %p146, %p147
      %p149 = scmp.ne.s32.totalorder %s137, %s138
      %p150 = scmp.eq.s32.totalorder %s23, 1
      %p151 = por %p149, %p150
      %p153 = scmp.ne.s32.totalorder %s138, %s152
      %p154 = scmp.eq.s32.totalorder %s23, 0
      %p155 = por %p153, %p154
      %s157 = sadd.s32 %s156, 1
      %p160 = scmp.eq.s32.totalorder %s17, 1
      %p161 = scmp.ne.s32.totalorder %s156, %s158
      %p162 = scmp.eq.s32.totalorder %s17, 0
      %p163 = por %p161, %p162
      %p164 = scmp.ne.s32.totalorder %s156, %s158
      %p165 = scmp.eq.s32.totalorder %s22, 1
      %p166 = por %p164, %p165
      %p167 = scmp.ne.s32.totalorder %s158, %s159
      %p168 = scmp.eq.s32.totalorder %s22, 0
      %p169 = por %p167, %p168
      %p170 = scmp.ne.s32.totalorder %s158, %s159
      %p171 = scmp.eq.s32.totalorder %s23, 1
      %p172 = por %p170, %p171
      %p174 = scmp.ne.s32.totalorder %s159, %s173
      %p175 = scmp.eq.s32.totalorder %s23, 0
      %p176 = por %p174, %p175
      %s177 = ssub.s32 %s25, %s39
      %p178 = scmp.eq.s32.totalorder %s177, 0
      %s180 = sadd.s32 %s179, 1
      %s181 = scalar_select %p178, %s179, %s180
      %p184 = pneg %p178
      %p185 = scmp.eq.s32.totalorder %s17, 1
      %p186 = por %p184, %p185
      %p187 = scmp.ne.s32.totalorder %s179, %s182
      %p188 = scmp.eq.s32.totalorder %s17, 0
      %p189 = por %p187, %p188
      %p190 = scmp.ne.s32.totalorder %s179, %s182
      %p191 = scmp.eq.s32.totalorder %s22, 1
      %p192 = por %p190, %p191
      %p193 = scmp.ne.s32.totalorder %s182, %s183
      %p194 = scmp.eq.s32.totalorder %s22, 0
      %p195 = por %p193, %p194
      %p196 = scmp.ne.s32.totalorder %s182, %s183
      %p197 = scmp.eq.s32.totalorder %s23, 1
      %p198 = por %p196, %p197
      %p200 = scmp.ne.s32.totalorder %s183, %s199
      %p201 = scmp.eq.s32.totalorder %s23, 0
      %p202 = por %p200, %p201
      %p203 = scmp.le.s32.totalorder 1, %s17
      %p204 = scmp.lt.s32.totalorder %s17, 3
      %p205 = pnand %p203, %p204
      %p206 = pneg %p205
      // Predicated region
      $region9: #{tpu_custom_call.1} parent=5 // pred_check
        _
      $region10: #{tpu_custom_call.1} parent=5 // pred_check_branch
        %208 = sbr.rel (%p205) target = $region12
      $region11: #{tpu_custom_call.1} parent=5 // pred_region
        %s209 = ssub.s32 %s17, 1
        // Predicated region
        $region13: #{tpu_custom_call.1} parent=11 // pred_check
          %p210 = pneg %p57
        $region14: #{tpu_custom_call.1} parent=11 // pred_check_branch
          %212 = sbr.rel (%p210) target = $region16
        $region15: #{tpu_custom_call.1} parent=11 // pred_region
          %s214 = ssub.s32 16, 16
          %215 = vsyncadd [#allocation8], %s214
          %218 = dma.hbm_to_smem %s0, 16, [#allocation5], [#allocation8]
        $region16: #{tpu_custom_call.1} parent=11 // pred_fallthru
          _
        // Predicated region
        $region17: #{tpu_custom_call.1} parent=11 // pred_check
          %p219 = pneg %p85
        $region18: #{tpu_custom_call.1} parent=11 // pred_check_branch
          %221 = sbr.rel (%p219) target = $region20
        $region19: #{tpu_custom_call.1} parent=11 // pred_region
          %s222 = smul.u32 32, %s28
          %s223 = smul.u32 2, %s29
          %s225 = ssub.s32 4096, 4096
          %226 = vsyncadd [#allocation6], %s225
          %s227 = smul.addr %s222, 2
          %s228 = sadd.s32 %s223, %s227
          %s229 = smul.addr %s228, 64
          %s230 = scalar_lea.hbm %s1, %s229
          %s231 = sshll.u32 [#allocation9], 4
          %s232 = int_to_ptr.vmem [resolvable:$true] %s231
          %237 = dma.hbm_to_vmem [thread:$0]  %s230, 4096, %s232, [#allocation6], 128, 128, 8
        $region20: #{tpu_custom_call.1} parent=11 // pred_fallthru
          _
        // Predicated region
        $region21: #{tpu_custom_call.1} parent=11 // pred_check
          %p238 = pneg %p106
        $region22: #{tpu_custom_call.1} parent=11 // pred_check_branch
          %240 = sbr.rel (%p238) target = $region24
        $region23: #{tpu_custom_call.1} parent=11 // pred_region
          %s242 = ssub.s32 4096, 4096
          %243 = vsyncadd [#allocation11], %s242
          %s244 = sshll.u32 [#allocation10], 4
          %s245 = int_to_ptr.vmem [resolvable:$true] %s244
          %250 = dma.hbm_to_vmem [thread:$0]  %s3, 4096, %s245, [#allocation11], 128, 128, 8
        $region24: #{tpu_custom_call.1} parent=11 // pred_fallthru
          _
        // Predicated region
        $region25: #{tpu_custom_call.1} parent=11 // pred_check
          %p251 = pneg %p127
        $region26: #{tpu_custom_call.1} parent=11 // pred_check_branch
          %253 = sbr.rel (%p251) target = $region28
        $region27: #{tpu_custom_call.1} parent=11 // pred_region
          _
        $region28: #{tpu_custom_call.1} parent=11 // pred_fallthru
          _
        // Predicated region
        $region29: #{tpu_custom_call.1} parent=11 // pred_check
          %p254 = pneg %p148
        $region30: #{tpu_custom_call.1} parent=11 // pred_check_branch
          %256 = sbr.rel (%p254) target = $region32
        $region31: #{tpu_custom_call.1} parent=11 // pred_region
          %s258 = ssub.s32 4096, 4096
          %259 = vsyncadd [#allocation11], %s258
          %s260 = sshll.u32 [#allocation12], 4
          %s261 = int_to_ptr.vmem [resolvable:$true] %s260
          %266 = dma.hbm_to_vmem [thread:$0]  %s5, 4096, %s261, [#allocation11], 128, 128, 8
        $region32: #{tpu_custom_call.1} parent=11 // pred_fallthru
          _
        // Predicated region
        $region33: #{tpu_custom_call.1} parent=11 // pred_check
          %p267 = pneg %p169
        $region34: #{tpu_custom_call.1} parent=11 // pred_check_branch
          %269 = sbr.rel (%p267) target = $region36
        $region35: #{tpu_custom_call.1} parent=11 // pred_region
          _
        $region36: #{tpu_custom_call.1} parent=11 // pred_fallthru
          _
      $region12: #{tpu_custom_call.1} parent=5 // pred_fallthru
        _
      %p270 = scmp.lt.s32.totalorder %s17, 2
      // Predicated region
      $region37: #{tpu_custom_call.1} parent=5 // pred_check
        %p271 = pneg %p270
      $region38: #{tpu_custom_call.1} parent=5 // pred_check_branch
        %273 = sbr.rel (%p271) target = $region40
      $region39: #{tpu_custom_call.1} parent=5 // pred_region
        _
      $region40: #{tpu_custom_call.1} parent=5 // pred_fallthru
        _
      %p274 = scmp.le.s32.totalorder 1, %s17
      %p275 = scmp.lt.s32.totalorder %s17, 3
      %p276 = pnand %p274, %p275
      %p277 = pneg %p276
      // Predicated region
      $region41: #{tpu_custom_call.1} parent=5 // pred_check
        _
      $region42: #{tpu_custom_call.1} parent=5 // pred_check_branch
        %279 = sbr.rel (%p276) target = $region44
      $region43: #{tpu_custom_call.1} parent=5 // pred_region
        %s280 = ssub.s32 %s17, 1
        // Predicated region
        $region45: #{tpu_custom_call.1} parent=43 // pred_check
          %p281 = pneg %p57
        $region46: #{tpu_custom_call.1} parent=43 // pred_check_branch
          %283 = sbr.rel (%p281) target = $region48
        $region47: #{tpu_custom_call.1} parent=43 // pred_region
          %284 = dma.done [#allocation8], 16
        $region48: #{tpu_custom_call.1} parent=43 // pred_fallthru
          _
        // Predicated region
        $region49: #{tpu_custom_call.1} parent=43 // pred_check
          %p285 = pneg %p85
        $region50: #{tpu_custom_call.1} parent=43 // pred_check_branch
          %287 = sbr.rel (%p285) target = $region52
        $region51: #{tpu_custom_call.1} parent=43 // pred_region
          %288 = dma.done [#allocation6], 4096
        $region52: #{tpu_custom_call.1} parent=43 // pred_fallthru
          _
        // Predicated region
        $region53: #{tpu_custom_call.1} parent=43 // pred_check
          %p289 = pneg %p106
        $region54: #{tpu_custom_call.1} parent=43 // pred_check_branch
          %291 = sbr.rel (%p289) target = $region56
        $region55: #{tpu_custom_call.1} parent=43 // pred_region
          %292 = dma.done [#allocation11], 4096
        $region56: #{tpu_custom_call.1} parent=43 // pred_fallthru
          _
        // Predicated region
        $region57: #{tpu_custom_call.1} parent=43 // pred_check
          %p293 = pneg %p148
        $region58: #{tpu_custom_call.1} parent=43 // pred_check_branch
          %295 = sbr.rel (%p293) target = $region60
        $region59: #{tpu_custom_call.1} parent=43 // pred_region
          %296 = dma.done [#allocation11], 4096
        $region60: #{tpu_custom_call.1} parent=43 // pred_fallthru
          _
        %297 = sfence
        %p298 = pneg %p57
        %p299 = pneg %p54
        %p300 = pneg %p85
        %p301 = pneg %p82
        %p302 = pneg %p106
        %p303 = pneg %p103
        %p304 = pneg %p127
        %p305 = pneg %p124
        %p306 = pneg %p148
        %p307 = pneg %p145
        %p308 = pneg %p169
        %p309 = pneg %p166
        %p310 = pneg %p195
        %p311 = pneg %p192
        %s312 = smul.u32 32, %s28
        %s313 = smul.u32 2, %s29
        %s314 = smul.u32 32, %s28
        %p316 = scmp.eq.s32.totalorder %s27, 0
        %p317 = scmp.eq.s32.totalorder %s28, 0
        %p318 = pnand %p316, %p317
        %p319 = pneg %p318
        %p320 = scmp.eq.s32.totalorder %s29, 0
        %p321 = pnand %p319, %p320
        %p322 = pneg %p321
        // Predicated region
        $region61: #{tpu_custom_call.1} parent=43 // pred_check
          _
        $region62: #{tpu_custom_call.1} parent=43 // pred_check_branch
          %324 = sbr.rel (%p321) target = $region64
        $region63: #{tpu_custom_call.1} parent=43 // pred_region
          // Predicated region
          $region65: #{tpu_custom_call.1} parent=63 // pred_check
            _
          $region66: #{tpu_custom_call.1} parent=63 // pred_check_branch
            %326 = sbr.rel target = $region68
          $region67: #{tpu_custom_call.1} parent=63 // pred_region
            %327 = sst [smem:[#allocation16]] [#allocation15]
            %328 = sst [smem:[#allocation17]] [#allocation14]
          $region68: #{tpu_custom_call.1} parent=63 // pred_fallthru
            _
          %330 = shalt.err (0)
          %s332 = sshll.u32 [#allocation2], 4
          %s333 = int_to_ptr.vmem [resolvable:$true] %s332
          %335 = dma.hbm_to_vmem [thread:$0]  %s2, 4096, %s333, [#allocation4]
          %s336 = smul.u32 256, 1
          %s337 = sshll.u32 %s336, 4
          %338 = dma.done [#allocation4], %s337
        $region64: #{tpu_custom_call.1} parent=43 // pred_fallthru
          _
        // Predicated region
        $region69: #{tpu_custom_call.1} parent=43 // pred_check
          %p339 = pneg %p320
        $region70: #{tpu_custom_call.1} parent=43 // pred_check_branch
          %341 = sbr.rel (%p339) target = $region72
        $region71: #{tpu_custom_call.1} parent=43 // pred_region
          %342 = vst [vmem:[#allocation3] sm:$0xff] 0.0
          %343 = vst [vmem:[#allocation3 + $0x8] sm:$0xff] 0.0
          %344 = vst [vmem:[#allocation3 + $0x10] sm:$0xff] 0.0
          %345 = vst [vmem:[#allocation3 + $0x18] sm:$0xff] 0.0
          %346 = vst [vmem:[#allocation3 + $0x20] sm:$0xff] 0.0
          %347 = vst [vmem:[#allocation3 + $0x28] sm:$0xff] 0.0
          %348 = vst [vmem:[#allocation3 + $0x30] sm:$0xff] 0.0
          %349 = vst [vmem:[#allocation3 + $0x38] sm:$0xff] 0.0
          %350 = vst [vmem:[#allocation3 + $0x40] sm:$0xff] 0.0
          %351 = vst [vmem:[#allocation3 + $0x48] sm:$0xff] 0.0
          %352 = vst [vmem:[#allocation3 + $0x50] sm:$0xff] 0.0
          %353 = vst [vmem:[#allocation3 + $0x58] sm:$0xff] 0.0
          %354 = vst [vmem:[#allocation3 + $0x60] sm:$0xff] 0.0
          %355 = vst [vmem:[#allocation3 + $0x68] sm:$0xff] 0.0
          %356 = vst [vmem:[#allocation3 + $0x70] sm:$0xff] 0.0
          %357 = vst [vmem:[#allocation3 + $0x78] sm:$0xff] 0.0
          %358 = vst [vmem:[#allocation3 + $0x80] sm:$0xff] 0.0
          %359 = vst [vmem:[#allocation3 + $0x88] sm:$0xff] 0.0
          %360 = vst [vmem:[#allocation3 + $0x90] sm:$0xff] 0.0
          %361 = vst [vmem:[#allocation3 + $0x98] sm:$0xff] 0.0
          %362 = vst [vmem:[#allocation3 + $0xa0] sm:$0xff] 0.0
          %363 = vst [vmem:[#allocation3 + $0xa8] sm:$0xff] 0.0
          %364 = vst [vmem:[#allocation3 + $0xb0] sm:$0xff] 0.0
          %365 = vst [vmem:[#allocation3 + $0xb8] sm:$0xff] 0.0
          %366 = vst [vmem:[#allocation3 + $0xc0] sm:$0xff] 0.0
          %367 = vst [vmem:[#allocation3 + $0xc8] sm:$0xff] 0.0
          %368 = vst [vmem:[#allocation3 + $0xd0] sm:$0xff] 0.0
          %369 = vst [vmem:[#allocation3 + $0xd8] sm:$0xff] 0.0
          %370 = vst [vmem:[#allocation3 + $0xe0] sm:$0xff] 0.0
          %371 = vst [vmem:[#allocation3 + $0xe8] sm:$0xff] 0.0
          %372 = vst [vmem:[#allocation3 + $0xf0] sm:$0xff] 0.0
          %373 = vst [vmem:[#allocation3 + $0xf8] sm:$0xff] 0.0
        $region72: #{tpu_custom_call.1} parent=43 // pred_fallthru
          _
        %p374 = scmp.lt.s32.totalorder %s27, 0
        %s375 = ssub.s32 0, %s27
        %s376 = scalar_select %p374, %s375, %s27
        %s377 = sand.u32 %s376, 1
        %s378 = ssub.s32 0, %s377
        %s379 = scalar_select %p374, %s378, %s377
        %p380 = scmp.ne.s32.totalorder %s379, 0
        %p381 = scmp.lt.s32.totalorder %s379, 0
        %p382 = pnand %p381, %p380
        %p383 = pneg %p382
        %s384 = sadd.s32 %s379, 2
        %s385 = scalar_select %p383, %s384, %s379
        %s386 = ssub.s32 1, %s385
        %s387 = smul.u32 %s29, 256
        %s388 = smul.u32 %s385, 256
        %s389 = sadd.s32 %s387, %s388
        %s390 = scalar_lea.vmem [#allocation2], %s389
        %v391 = vld [vmem:[%s390] sm:$0xff]
        %v392 = vld [vmem:[%s390 + $0x8] sm:$0xff]
        %v393 = vld [vmem:[%s390 + $0x10] sm:$0xff]
        %v394 = vld [vmem:[%s390 + $0x18] sm:$0xff]
        %v395 = vld [vmem:[%s390 + $0x20] sm:$0xff]
        %v396 = vld [vmem:[%s390 + $0x28] sm:$0xff]
        %v397 = vld [vmem:[%s390 + $0x30] sm:$0xff]
        %v398 = vld [vmem:[%s390 + $0x38] sm:$0xff]
        %v399 = vld [vmem:[%s390 + $0x40] sm:$0xff]
        %v400 = vld [vmem:[%s390 + $0x48] sm:$0xff]
        %v401 = vld [vmem:[%s390 + $0x50] sm:$0xff]
        %v402 = vld [vmem:[%s390 + $0x58] sm:$0xff]
        %v403 = vld [vmem:[%s390 + $0x60] sm:$0xff]
        %v404 = vld [vmem:[%s390 + $0x68] sm:$0xff]
        %v405 = vld [vmem:[%s390 + $0x70] sm:$0xff]
        %v406 = vld [vmem:[%s390 + $0x78] sm:$0xff]
        %v407 = vld [vmem:[%s390 + $0x80] sm:$0xff]
        %v408 = vld [vmem:[%s390 + $0x88] sm:$0xff]
        %v409 = vld [vmem:[%s390 + $0x90] sm:$0xff]
        %v410 = vld [vmem:[%s390 + $0x98] sm:$0xff]
        %v411 = vld [vmem:[%s390 + $0xa0] sm:$0xff]
        %v412 = vld [vmem:[%s390 + $0xa8] sm:$0xff]
        %v413 = vld [vmem:[%s390 + $0xb0] sm:$0xff]
        %v414 = vld [vmem:[%s390 + $0xb8] sm:$0xff]
        %v415 = vld [vmem:[%s390 + $0xc0] sm:$0xff]
        %v416 = vld [vmem:[%s390 + $0xc8] sm:$0xff]
        %v417 = vld [vmem:[%s390 + $0xd0] sm:$0xff]
        %v418 = vld [vmem:[%s390 + $0xd8] sm:$0xff]
        %v419 = vld [vmem:[%s390 + $0xe0] sm:$0xff]
        %v420 = vld [vmem:[%s390 + $0xe8] sm:$0xff]
        %v421 = vld [vmem:[%s390 + $0xf0] sm:$0xff]
        %v422 = vld [vmem:[%s390 + $0xf8] sm:$0xff]
        %v423 = vmax.f32 %v391, 0.0
        %v424 = vmax.f32 %v392, 0.0
        %v425 = vmax.f32 %v393, 0.0
        %v426 = vmax.f32 %v394, 0.0
        %v427 = vmax.f32 %v395, 0.0
        %v428 = vmax.f32 %v396, 0.0
        %v429 = vmax.f32 %v397, 0.0
        %v430 = vmax.f32 %v398, 0.0
        %v431 = vmax.f32 %v399, 0.0
        %v432 = vmax.f32 %v400, 0.0
        %v433 = vmax.f32 %v401, 0.0
        %v434 = vmax.f32 %v402, 0.0
        %v435 = vmax.f32 %v403, 0.0
        %v436 = vmax.f32 %v404, 0.0
        %v437 = vmax.f32 %v405, 0.0
        %v438 = vmax.f32 %v406, 0.0
        %v439 = vmax.f32 %v407, 0.0
        %v440 = vmax.f32 %v408, 0.0
        %v441 = vmax.f32 %v409, 0.0
        %v442 = vmax.f32 %v410, 0.0
        %v443 = vmax.f32 %v411, 0.0
        %v444 = vmax.f32 %v412, 0.0
        %v445 = vmax.f32 %v413, 0.0
        %v446 = vmax.f32 %v414, 0.0
        %v447 = vmax.f32 %v415, 0.0
        %v448 = vmax.f32 %v416, 0.0
        %v449 = vmax.f32 %v417, 0.0
        %v450 = vmax.f32 %v418, 0.0
        %v451 = vmax.f32 %v419, 0.0
        %v452 = vmax.f32 %v420, 0.0
        %v453 = vmax.f32 %v421, 0.0
        %v454 = vmax.f32 %v422, 0.0
        %v455 = vpack.c.bf16 %v424, %v423
        %v456 = vpack.c.bf16 %v426, %v425
        %v457 = vpack.c.bf16 %v428, %v427
        %v458 = vpack.c.bf16 %v430, %v429
        %v459 = vpack.c.bf16 %v432, %v431
        %v460 = vpack.c.bf16 %v434, %v433
        %v461 = vpack.c.bf16 %v436, %v435
        %v462 = vpack.c.bf16 %v438, %v437
        %v463 = vpack.c.bf16 %v440, %v439
        %v464 = vpack.c.bf16 %v442, %v441
        %v465 = vpack.c.bf16 %v444, %v443
        %v466 = vpack.c.bf16 %v446, %v445
        %v467 = vpack.c.bf16 %v448, %v447
        %v468 = vpack.c.bf16 %v450, %v449
        %v469 = vpack.c.bf16 %v452, %v451
        %v470 = vpack.c.bf16 %v454, %v453
        %v471 = vld [vmem:[#allocation3] sm:$0xff]
        %v472 = vld [vmem:[#allocation3 + $0x8] sm:$0xff]
        %v473 = vld [vmem:[#allocation3 + $0x10] sm:$0xff]
        %v474 = vld [vmem:[#allocation3 + $0x18] sm:$0xff]
        %v475 = vld [vmem:[#allocation3 + $0x20] sm:$0xff]
        %v476 = vld [vmem:[#allocation3 + $0x28] sm:$0xff]
        %v477 = vld [vmem:[#allocation3 + $0x30] sm:$0xff]
        %v478 = vld [vmem:[#allocation3 + $0x38] sm:$0xff]
        %v479 = vld [vmem:[#allocation3 + $0x40] sm:$0xff]
        %v480 = vld [vmem:[#allocation3 + $0x48] sm:$0xff]
        %v481 = vld [vmem:[#allocation3 + $0x50] sm:$0xff]
        %v482 = vld [vmem:[#allocation3 + $0x58] sm:$0xff]
        %v483 = vld [vmem:[#allocation3 + $0x60] sm:$0xff]
        %v484 = vld [vmem:[#allocation3 + $0x68] sm:$0xff]
        %v485 = vld [vmem:[#allocation3 + $0x70] sm:$0xff]
        %v486 = vld [vmem:[#allocation3 + $0x78] sm:$0xff]
        %v487 = vld [vmem:[#allocation3 + $0x80] sm:$0xff]
        %v488 = vld [vmem:[#allocation3 + $0x88] sm:$0xff]
        %v489 = vld [vmem:[#allocation3 + $0x90] sm:$0xff]
        %v490 = vld [vmem:[#allocation3 + $0x98] sm:$0xff]
        %v491 = vld [vmem:[#allocation3 + $0xa0] sm:$0xff]
        %v492 = vld [vmem:[#allocation3 + $0xa8] sm:$0xff]
        %v493 = vld [vmem:[#allocation3 + $0xb0] sm:$0xff]
        %v494 = vld [vmem:[#allocation3 + $0xb8] sm:$0xff]
        %v495 = vld [vmem:[#allocation3 + $0xc0] sm:$0xff]
        %v496 = vld [vmem:[#allocation3 + $0xc8] sm:$0xff]
        %v497 = vld [vmem:[#allocation3 + $0xd0] sm:$0xff]
        %v498 = vld [vmem:[#allocation3 + $0xd8] sm:$0xff]
        %v499 = vld [vmem:[#allocation3 + $0xe0] sm:$0xff]
        %v500 = vld [vmem:[#allocation3 + $0xe8] sm:$0xff]
        %v501 = vld [vmem:[#allocation3 + $0xf0] sm:$0xff]
        %v502 = vld [vmem:[#allocation3 + $0xf8] sm:$0xff]
        %v503 = vld [vmem:[#allocation9] sm:$0xff]
        %v504 = vld [vmem:[#allocation9 + $0x8] sm:$0xff]
        %v505 = vld [vmem:[#allocation9 + $0x10] sm:$0xff]
        %v506 = vld [vmem:[#allocation9 + $0x18] sm:$0xff]
        %v507 = vld [vmem:[#allocation9 + $0x20] sm:$0xff]
        %v508 = vld [vmem:[#allocation9 + $0x28] sm:$0xff]
        %v509 = vld [vmem:[#allocation9 + $0x30] sm:$0xff]
        %v510 = vld [vmem:[#allocation9 + $0x38] sm:$0xff]
        %v511 = vld [vmem:[#allocation9 + $0x40] sm:$0xff]
        %v512 = vld [vmem:[#allocation9 + $0x48] sm:$0xff]
        %v513 = vld [vmem:[#allocation9 + $0x50] sm:$0xff]
        %v514 = vld [vmem:[#allocation9 + $0x58] sm:$0xff]
        %v515 = vld [vmem:[#allocation9 + $0x60] sm:$0xff]
        %v516 = vld [vmem:[#allocation9 + $0x68] sm:$0xff]
        %v517 = vld [vmem:[#allocation9 + $0x70] sm:$0xff]
        %v518 = vld [vmem:[#allocation9 + $0x78] sm:$0xff]
        %v519 = vld [vmem:[#allocation9 + $0x80] sm:$0xff]
        %v520 = vld [vmem:[#allocation9 + $0x88] sm:$0xff]
        %v521 = vld [vmem:[#allocation9 + $0x90] sm:$0xff]
        %v522 = vld [vmem:[#allocation9 + $0x98] sm:$0xff]
        %v523 = vld [vmem:[#allocation9 + $0xa0] sm:$0xff]
        %v524 = vld [vmem:[#allocation9 + $0xa8] sm:$0xff]
        %v525 = vld [vmem:[#allocation9 + $0xb0] sm:$0xff]
        %v526 = vld [vmem:[#allocation9 + $0xb8] sm:$0xff]
        %v527 = vld [vmem:[#allocation9 + $0xc0] sm:$0xff]
        %v528 = vld [vmem:[#allocation9 + $0xc8] sm:$0xff]
        %v529 = vld [vmem:[#allocation9 + $0xd0] sm:$0xff]
        %v530 = vld [vmem:[#allocation9 + $0xd8] sm:$0xff]
        %v531 = vld [vmem:[#allocation9 + $0xe0] sm:$0xff]
        %v532 = vld [vmem:[#allocation9 + $0xe8] sm:$0xff]
        %v533 = vld [vmem:[#allocation9 + $0xf0] sm:$0xff]
        %v534 = vld [vmem:[#allocation9 + $0xf8] sm:$0xff]
        %v567 = vunpack.c.l.b16 %v503
        %v568 = vunpack.c.h.b16 %v503
        %v569 = vunpack.c.l.b16 %v504
        %v570 = vunpack.c.h.b16 %v504
        %v571 = vunpack.c.l.b16 %v505
        %v572 = vunpack.c.h.b16 %v505
        %v573 = vunpack.c.l.b16 %v506
        %v574 = vunpack.c.h.b16 %v506
        %v575 = vunpack.c.l.b16 %v507
        %v576 = vunpack.c.h.b16 %v507
        %v577 = vunpack.c.l.b16 %v508
        %v578 = vunpack.c.h.b16 %v508
        %v579 = vunpack.c.l.b16 %v509
        %v580 = vunpack.c.h.b16 %v509
        %v581 = vunpack.c.l.b16 %v510
        %v582 = vunpack.c.h.b16 %v510
        %v583 = vunpack.c.l.b16 %v511
        %v584 = vunpack.c.h.b16 %v511
        %v585 = vunpack.c.l.b16 %v512
        %v586 = vunpack.c.h.b16 %v512
        %v587 = vunpack.c.l.b16 %v513
        %v588 = vunpack.c.h.b16 %v513
        %v589 = vunpack.c.l.b16 %v514
        %v590 = vunpack.c.h.b16 %v514
        %v591 = vunpack.c.l.b16 %v515
        %v592 = vunpack.c.h.b16 %v515
        %v593 = vunpack.c.l.b16 %v516
        %v594 = vunpack.c.h.b16 %v516
        %v595 = vunpack.c.l.b16 %v517
        %v596 = vunpack.c.h.b16 %v517
        %v597 = vunpack.c.l.b16 %v518
        %v598 = vunpack.c.h.b16 %v518
        %v599 = vunpack.c.l.b16 %v519
        %v600 = vunpack.c.h.b16 %v519
        %v601 = vunpack.c.l.b16 %v520
        %v602 = vunpack.c.h.b16 %v520
        %v603 = vunpack.c.l.b16 %v521
        %v604 = vunpack.c.h.b16 %v521
        %v605 = vunpack.c.l.b16 %v522
        %v606 = vunpack.c.h.b16 %v522
        %v607 = vunpack.c.l.b16 %v523
        %v608 = vunpack.c.h.b16 %v523
        %v609 = vunpack.c.l.b16 %v524
        %v610 = vunpack.c.h.b16 %v524
        %v611 = vunpack.c.l.b16 %v525
        %v612 = vunpack.c.h.b16 %v525
        %v613 = vunpack.c.l.b16 %v526
        %v614 = vunpack.c.h.b16 %v526
        %v615 = vunpack.c.l.b16 %v527
        %v616 = vunpack.c.h.b16 %v527
        %v617 = vunpack.c.l.b16 %v528
        %v618 = vunpack.c.h.b16 %v528
        %v619 = vunpack.c.l.b16 %v529
        %v620 = vunpack.c.h.b16 %v529
        %v621 = vunpack.c.l.b16 %v530
        %v622 = vunpack.c.h.b16 %v530
        %v623 = vunpack.c.l.b16 %v531
        %v624 = vunpack.c.h.b16 %v531
        %v625 = vunpack.c.l.b16 %v532
        %v626 = vunpack.c.h.b16 %v532
        %v627 = vunpack.c.l.b16 %v533
        %v628 = vunpack.c.h.b16 %v533
        %v629 = vunpack.c.l.b16 %v534
        %v630 = vunpack.c.h.b16 %v534
        %v631 = vpack.c.b16 %v569, %v567
        %v632 = vpack.c.b16 %v570, %v568
        %v633 = vpack.c.b16 %v573, %v571
        %v634 = vpack.c.b16 %v574, %v572
        %v635 = vpack.c.b16 %v577, %v575
        %v636 = vpack.c.b16 %v578, %v576
        %v637 = vpack.c.b16 %v581, %v579
        %v638 = vpack.c.b16 %v582, %v580
        %v639 = vpack.c.b16 %v585, %v583
        %v640 = vpack.c.b16 %v586, %v584
        %v641 = vpack.c.b16 %v589, %v587
        %v642 = vpack.c.b16 %v590, %v588
        %v643 = vpack.c.b16 %v593, %v591
        %v644 = vpack.c.b16 %v594, %v592
        %v645 = vpack.c.b16 %v597, %v595
        %v646 = vpack.c.b16 %v598, %v596
        %v647 = vpack.c.b16 %v601, %v599
        %v648 = vpack.c.b16 %v602, %v600
        %v649 = vpack.c.b16 %v605, %v603
        %v650 = vpack.c.b16 %v606, %v604
        %v651 = vpack.c.b16 %v609, %v607
        %v652 = vpack.c.b16 %v610, %v608
        %v653 = vpack.c.b16 %v613, %v611
        %v654 = vpack.c.b16 %v614, %v612
        %v655 = vpack.c.b16 %v617, %v615
        %v656 = vpack.c.b16 %v618, %v616
        %v657 = vpack.c.b16 %v621, %v619
        %v658 = vpack.c.b16 %v622, %v620
        %v659 = vpack.c.b16 %v625, %v623
        %v660 = vpack.c.b16 %v626, %v624
        %v661 = vpack.c.b16 %v629, %v627
        %v662 = vpack.c.b16 %v630, %v628
        %695 = vmatprep.subr.bf16.mxu0 0
        %696 = vmatpush1.bf16.msra.mxu0 %v462
        %697 = vmatprep.subr.bf16.mxu0 0
        %698 = vmatpush1.bf16.msra.mxu0 %v461
        %699 = vmatprep.subr.bf16.mxu0 0
        %700 = vmatpush1.bf16.msra.mxu0 %v460
        %701 = vmatprep.subr.bf16.mxu0 0
        %702 = vmatpush1.bf16.msra.mxu0 %v459
        %703 = vmatprep.subr.bf16.mxu0 0
        %704 = vmatpush1.bf16.msra.mxu0 %v458
        %705 = vmatprep.subr.bf16.mxu0 0
        %706 = vmatpush1.bf16.msra.mxu0 %v457
        %707 = vmatprep.subr.bf16.mxu0 0
        %708 = vmatpush1.bf16.msra.mxu0 %v456
        %709 = vmatprep.subr.bf16.mxu0 0
        %710 = vmatpush1.bf16.msra.mxu0 %v455
        %711 = vmatprep.subr.bf16.mxu0 0
        %712 = vmatpush2.bf16.msra.mxu0 %v470
        %713 = vmatprep.subr.bf16.mxu0 0
        %714 = vmatpush2.bf16.msra.mxu0 %v469
        %715 = vmatprep.subr.bf16.mxu0 0
        %716 = vmatpush2.bf16.msra.mxu0 %v468
        %717 = vmatprep.subr.bf16.mxu0 0
        %718 = vmatpush2.bf16.msra.mxu0 %v467
        %719 = vmatprep.subr.bf16.mxu0 0
        %720 = vmatpush2.bf16.msra.mxu0 %v466
        %721 = vmatprep.subr.bf16.mxu0 0
        %722 = vmatpush2.bf16.msra.mxu0 %v465
        %723 = vmatprep.subr.bf16.mxu0 0
        %724 = vmatpush2.bf16.msra.mxu0 %v464
        %725 = vmatprep.subr.bf16.mxu0 0
        %726 = vmatpush2.bf16.msra.mxu0 %v463
        %727 = vmatprep.mubr.bf16.mxu0 %v632
        %728 = vmatmul.mubr.bf16.gmra.mxu0 %v631
        %v729 = vpop.f32.mrf.mxu0
        %v730 = vadd.f32 0.0, %v729
        %v731 = vpop.f32.mrf.mxu0
        %v732 = vpop.f32.mrf.mxu0
        %v733 = vadd.f32 0.0, %v732
        %v734 = vpop.f32.mrf.mxu0
        %735 = vmatprep.mubr.bf16.mxu0 %v634
        %736 = vmatmul.mubr.bf16.gmra.mxu0 %v633
        %v737 = vpop.f32.mrf.mxu0
        %v738 = vadd.f32 0.0, %v737
        %v739 = vpop.f32.mrf.mxu0
        %v740 = vpop.f32.mrf.mxu0
        %v741 = vadd.f32 0.0, %v740
        %v742 = vpop.f32.mrf.mxu0
        %743 = vmatprep.mubr.bf16.mxu0 %v636
        %744 = vmatmul.mubr.bf16.gmra.mxu0 %v635
        %v745 = vpop.f32.mrf.mxu0
        %v746 = vadd.f32 0.0, %v745
        %v747 = vpop.f32.mrf.mxu0
        %v748 = vpop.f32.mrf.mxu0
        %v749 = vadd.f32 0.0, %v748
        %v750 = vpop.f32.mrf.mxu0
        %751 = vmatprep.mubr.bf16.mxu0 %v638
        %752 = vmatmul.mubr.bf16.gmra.mxu0 %v637
        %v753 = vpop.f32.mrf.mxu0
        %v754 = vadd.f32 0.0, %v753
        %v755 = vpop.f32.mrf.mxu0
        %v756 = vpop.f32.mrf.mxu0
        %v757 = vadd.f32 0.0, %v756
        %v758 = vpop.f32.mrf.mxu0
        %759 = vmatprep.mubr.bf16.mxu0 %v640
        %760 = vmatmul.mubr.bf16.gmra.mxu0 %v639
        %v761 = vpop.f32.mrf.mxu0
        %v762 = vadd.f32 0.0, %v761
        %v763 = vpop.f32.mrf.mxu0
        %v764 = vpop.f32.mrf.mxu0
        %v765 = vadd.f32 0.0, %v764
        %v766 = vpop.f32.mrf.mxu0
        %767 = vmatprep.mubr.bf16.mxu0 %v642
        %768 = vmatmul.mubr.bf16.gmra.mxu0 %v641
        %v769 = vpop.f32.mrf.mxu0
        %v770 = vadd.f32 0.0, %v769
        %v771 = vpop.f32.mrf.mxu0
        %v772 = vpop.f32.mrf.mxu0
        %v773 = vadd.f32 0.0, %v772
        %v774 = vpop.f32.mrf.mxu0
        %775 = vmatprep.mubr.bf16.mxu0 %v644
        %776 = vmatmul.mubr.bf16.gmra.mxu0 %v643
        %v777 = vpop.f32.mrf.mxu0
        %v778 = vadd.f32 0.0, %v777
        %v779 = vpop.f32.mrf.mxu0
        %v780 = vpop.f32.mrf.mxu0
        %v781 = vadd.f32 0.0, %v780
        %v782 = vpop.f32.mrf.mxu0
        %783 = vmatprep.mubr.bf16.mxu0 %v646
        %784 = vmatmul.mubr.bf16.gmra.mxu0 %v645
        %v785 = vpop.f32.mrf.mxu0
        %v786 = vadd.f32 0.0, %v785
        %v787 = vpop.f32.mrf.mxu0
        %v788 = vpop.f32.mrf.mxu0
        %v789 = vadd.f32 0.0, %v788
        %v790 = vpop.f32.mrf.mxu0
        %791 = vmatprep.mubr.bf16.mxu0 %v648
        %792 = vmatmul.mubr.bf16.gmra.mxu0 %v647
        %v793 = vpop.f32.mrf.mxu0
        %v794 = vadd.f32 0.0, %v793
        %v795 = vpop.f32.mrf.mxu0
        %v796 = vpop.f32.mrf.mxu0
        %v797 = vadd.f32 0.0, %v796
        %v798 = vpop.f32.mrf.mxu0
        %799 = vmatprep.mubr.bf16.mxu0 %v650
        %800 = vmatmul.mubr.bf16.gmra.mxu0 %v649
        %v801 = vpop.f32.mrf.mxu0
        %v802 = vadd.f32 0.0, %v801
        %v803 = vpop.f32.mrf.mxu0
        %v804 = vpop.f32.mrf.mxu0
        %v805 = vadd.f32 0.0, %v804
        %v806 = vpop.f32.mrf.mxu0
        %807 = vmatprep.mubr.bf16.mxu0 %v652
        %808 = vmatmul.mubr.bf16.gmra.mxu0 %v651
        %v809 = vpop.f32.mrf.mxu0
        %v810 = vadd.f32 0.0, %v809
        %v811 = vpop.f32.mrf.mxu0
        %v812 = vpop.f32.mrf.mxu0
        %v813 = vadd.f32 0.0, %v812
        %v814 = vpop.f32.mrf.mxu0
        %815 = vmatprep.mubr.bf16.mxu0 %v654
        %816 = vmatmul.mubr.bf16.gmra.mxu0 %v653
        %v817 = vpop.f32.mrf.mxu0
        %v818 = vadd.f32 0.0, %v817
        %v819 = vpop.f32.mrf.mxu0
        %v820 = vpop.f32.mrf.mxu0
        %v821 = vadd.f32 0.0, %v820
        %v822 = vpop.f32.mrf.mxu0
        %823 = vmatprep.mubr.bf16.mxu0 %v656
        %824 = vmatmul.mubr.bf16.gmra.mxu0 %v655
        %v825 = vpop.f32.mrf.mxu0
        %v826 = vadd.f32 0.0, %v825
        %v827 = vpop.f32.mrf.mxu0
        %v828 = vpop.f32.mrf.mxu0
        %v829 = vadd.f32 0.0, %v828
        %v830 = vpop.f32.mrf.mxu0
        %831 = vmatprep.mubr.bf16.mxu0 %v658
        %832 = vmatmul.mubr.bf16.gmra.mxu0 %v657
        %v833 = vpop.f32.mrf.mxu0
        %v834 = vadd.f32 0.0, %v833
        %v835 = vpop.f32.mrf.mxu0
        %v836 = vpop.f32.mrf.mxu0
        %v837 = vadd.f32 0.0, %v836
        %v838 = vpop.f32.mrf.mxu0
        %839 = vmatprep.mubr.bf16.mxu0 %v660
        %840 = vmatmul.mubr.bf16.gmra.mxu0 %v659
        %v841 = vpop.f32.mrf.mxu0
        %v842 = vadd.f32 0.0, %v841
        %v843 = vpop.f32.mrf.mxu0
        %v844 = vpop.f32.mrf.mxu0
        %v845 = vadd.f32 0.0, %v844
        %v846 = vpop.f32.mrf.mxu0
        %847 = vmatprep.mubr.bf16.mxu0 %v662
        %848 = vmatmul.mubr.bf16.gmra.mxu0 %v661
        %v849 = vpop.f32.mrf.mxu0
        %v850 = vadd.f32 0.0, %v849
        %v851 = vpop.f32.mrf.mxu0
        %v852 = vpop.f32.mrf.mxu0
        %v853 = vadd.f32 0.0, %v852
        %v854 = vpop.f32.mrf.mxu0
        %855 = vdwg.mxu0
        %v856 = vadd.f32 %v471, %v730
        %v857 = vadd.f32 %v472, %v733
        %v858 = vadd.f32 %v473, %v738
        %v859 = vadd.f32 %v474, %v741
        %v860 = vadd.f32 %v475, %v746
        %v861 = vadd.f32 %v476, %v749
        %v862 = vadd.f32 %v477, %v754
        %v863 = vadd.f32 %v478, %v757
        %v864 = vadd.f32 %v479, %v762
        %v865 = vadd.f32 %v480, %v765
        %v866 = vadd.f32 %v481, %v770
        %v867 = vadd.f32 %v482, %v773
        %v868 = vadd.f32 %v483, %v778
        %v869 = vadd.f32 %v484, %v781
        %v870 = vadd.f32 %v485, %v786
        %v871 = vadd.f32 %v486, %v789
        %v872 = vadd.f32 %v487, %v794
        %v873 = vadd.f32 %v488, %v797
        %v874 = vadd.f32 %v489, %v802
        %v875 = vadd.f32 %v490, %v805
        %v876 = vadd.f32 %v491, %v810
        %v877 = vadd.f32 %v492, %v813
        %v878 = vadd.f32 %v493, %v818
        %v879 = vadd.f32 %v494, %v821
        %v880 = vadd.f32 %v495, %v826
        %v881 = vadd.f32 %v496, %v829
        %v882 = vadd.f32 %v497, %v834
        %v883 = vadd.f32 %v498, %v837
        %v884 = vadd.f32 %v499, %v842
        %v885 = vadd.f32 %v500, %v845
        %v886 = vadd.f32 %v501, %v850
        %v887 = vadd.f32 %v502, %v853
        %888 = vst [vmem:[#allocation3] sm:$0xff] %v856
        %889 = vst [vmem:[#allocation3 + $0x8] sm:$0xff] %v857
        %890 = vst [vmem:[#allocation3 + $0x10] sm:$0xff] %v858
        %891 = vst [vmem:[#allocation3 + $0x18] sm:$0xff] %v859
        %892 = vst [vmem:[#allocation3 + $0x20] sm:$0xff] %v860
        %893 = vst [vmem:[#allocation3 + $0x28] sm:$0xff] %v861
        %894 = vst [vmem:[#allocation3 + $0x30] sm:$0xff] %v862
        %895 = vst [vmem:[#allocation3 + $0x38] sm:$0xff] %v863
        %896 = vst [vmem:[#allocation3 + $0x40] sm:$0xff] %v864
        %897 = vst [vmem:[#allocation3 + $0x48] sm:$0xff] %v865
        %898 = vst [vmem:[#allocation3 + $0x50] sm:$0xff] %v866
        %899 = vst [vmem:[#allocation3 + $0x58] sm:$0xff] %v867
        %900 = vst [vmem:[#allocation3 + $0x60] sm:$0xff] %v868
        %901 = vst [vmem:[#allocation3 + $0x68] sm:$0xff] %v869
        %902 = vst [vmem:[#allocation3 + $0x70] sm:$0xff] %v870
        %903 = vst [vmem:[#allocation3 + $0x78] sm:$0xff] %v871
        %904 = vst [vmem:[#allocation3 + $0x80] sm:$0xff] %v872
        %905 = vst [vmem:[#allocation3 + $0x88] sm:$0xff] %v873
        %906 = vst [vmem:[#allocation3 + $0x90] sm:$0xff] %v874
        %907 = vst [vmem:[#allocation3 + $0x98] sm:$0xff] %v875
        %908 = vst [vmem:[#allocation3 + $0xa0] sm:$0xff] %v876
        %909 = vst [vmem:[#allocation3 + $0xa8] sm:$0xff] %v877
        %910 = vst [vmem:[#allocation3 + $0xb0] sm:$0xff] %v878
        %911 = vst [vmem:[#allocation3 + $0xb8] sm:$0xff] %v879
        %912 = vst [vmem:[#allocation3 + $0xc0] sm:$0xff] %v880
        %913 = vst [vmem:[#allocation3 + $0xc8] sm:$0xff] %v881
        %914 = vst [vmem:[#allocation3 + $0xd0] sm:$0xff] %v882
        %915 = vst [vmem:[#allocation3 + $0xd8] sm:$0xff] %v883
        %916 = vst [vmem:[#allocation3 + $0xe0] sm:$0xff] %v884
        %917 = vst [vmem:[#allocation3 + $0xe8] sm:$0xff] %v885
        %918 = vst [vmem:[#allocation3 + $0xf0] sm:$0xff] %v886
        %919 = vst [vmem:[#allocation3 + $0xf8] sm:$0xff] %v887
        // Predicated region
        $region73: #{tpu_custom_call.1} parent=43 // pred_check
          %p920 = pneg %p320
        $region74: #{tpu_custom_call.1} parent=43 // pred_check_branch
          %922 = sbr.rel (%p920) target = $region76
        $region75: #{tpu_custom_call.1} parent=43 // pred_region
          %s923 = smul.u32 %s28, 256
          %s924 = sadd.s32 %s923, %s388
          %s925 = scalar_lea.vmem [#allocation2], %s924
          %v926 = vld [vmem:[%s925] sm:$0xff]
          %v927 = vld [vmem:[%s925 + $0x8] sm:$0xff]
          %v928 = vld [vmem:[%s925 + $0x10] sm:$0xff]
          %v929 = vld [vmem:[%s925 + $0x18] sm:$0xff]
          %v930 = vld [vmem:[%s925 + $0x20] sm:$0xff]
          %v931 = vld [vmem:[%s925 + $0x28] sm:$0xff]
          %v932 = vld [vmem:[%s925 + $0x30] sm:$0xff]
          %v933 = vld [vmem:[%s925 + $0x38] sm:$0xff]
          %v934 = vld [vmem:[%s925 + $0x40] sm:$0xff]
          %v935 = vld [vmem:[%s925 + $0x48] sm:$0xff]
          %v936 = vld [vmem:[%s925 + $0x50] sm:$0xff]
          %v937 = vld [vmem:[%s925 + $0x58] sm:$0xff]
          %v938 = vld [vmem:[%s925 + $0x60] sm:$0xff]
          %v939 = vld [vmem:[%s925 + $0x68] sm:$0xff]
          %v940 = vld [vmem:[%s925 + $0x70] sm:$0xff]
          %v941 = vld [vmem:[%s925 + $0x78] sm:$0xff]
          %v942 = vld [vmem:[%s925 + $0x80] sm:$0xff]
          %v943 = vld [vmem:[%s925 + $0x88] sm:$0xff]
          %v944 = vld [vmem:[%s925 + $0x90] sm:$0xff]
          %v945 = vld [vmem:[%s925 + $0x98] sm:$0xff]
          %v946 = vld [vmem:[%s925 + $0xa0] sm:$0xff]
          %v947 = vld [vmem:[%s925 + $0xa8] sm:$0xff]
          %v948 = vld [vmem:[%s925 + $0xb0] sm:$0xff]
          %v949 = vld [vmem:[%s925 + $0xb8] sm:$0xff]
          %v950 = vld [vmem:[%s925 + $0xc0] sm:$0xff]
          %v951 = vld [vmem:[%s925 + $0xc8] sm:$0xff]
          %v952 = vld [vmem:[%s925 + $0xd0] sm:$0xff]
          %v953 = vld [vmem:[%s925 + $0xd8] sm:$0xff]
          %v954 = vld [vmem:[%s925 + $0xe0] sm:$0xff]
          %v955 = vld [vmem:[%s925 + $0xe8] sm:$0xff]
          %v956 = vld [vmem:[%s925 + $0xf0] sm:$0xff]
          %v957 = vld [vmem:[%s925 + $0xf8] sm:$0xff]
          %s958 = sld [smem:[#allocation5 + %s27]]
          %v959 = vstv %s958
          %v960 = vmul.f32 %v959, %v926
          %v961 = vmul.f32 %v959, %v927
          %v962 = vmul.f32 %v959, %v928
          %v963 = vmul.f32 %v959, %v929
          %v964 = vmul.f32 %v959, %v930
          %v965 = vmul.f32 %v959, %v931
          %v966 = vmul.f32 %v959, %v932
          %v967 = vmul.f32 %v959, %v933
          %v968 = vmul.f32 %v959, %v934
          %v969 = vmul.f32 %v959, %v935
          %v970 = vmul.f32 %v959, %v936
          %v971 = vmul.f32 %v959, %v937
          %v972 = vmul.f32 %v959, %v938
          %v973 = vmul.f32 %v959, %v939
          %v974 = vmul.f32 %v959, %v940
          %v975 = vmul.f32 %v959, %v941
          %v976 = vmul.f32 %v959, %v942
          %v977 = vmul.f32 %v959, %v943
          %v978 = vmul.f32 %v959, %v944
          %v979 = vmul.f32 %v959, %v945
          %v980 = vmul.f32 %v959, %v946
          %v981 = vmul.f32 %v959, %v947
          %v982 = vmul.f32 %v959, %v948
          %v983 = vmul.f32 %v959, %v949
          %v984 = vmul.f32 %v959, %v950
          %v985 = vmul.f32 %v959, %v951
          %v986 = vmul.f32 %v959, %v952
          %v987 = vmul.f32 %v959, %v953
          %v988 = vmul.f32 %v959, %v954
          %v989 = vmul.f32 %v959, %v955
          %v990 = vmul.f32 %v959, %v956
          %v991 = vmul.f32 %v959, %v957
          %v992 = vld [vmem:[#allocation3] sm:$0xff]
          %v993 = vld [vmem:[#allocation3 + $0x8] sm:$0xff]
          %v994 = vld [vmem:[#allocation3 + $0x10] sm:$0xff]
          %v995 = vld [vmem:[#allocation3 + $0x18] sm:$0xff]
          %v996 = vld [vmem:[#allocation3 + $0x20] sm:$0xff]
          %v997 = vld [vmem:[#allocation3 + $0x28] sm:$0xff]
          %v998 = vld [vmem:[#allocation3 + $0x30] sm:$0xff]
          %v999 = vld [vmem:[#allocation3 + $0x38] sm:$0xff]
          %v1000 = vld [vmem:[#allocation3 + $0x40] sm:$0xff]
          %v1001 = vld [vmem:[#allocation3 + $0x48] sm:$0xff]
          %v1002 = vld [vmem:[#allocation3 + $0x50] sm:$0xff]
          %v1003 = vld [vmem:[#allocation3 + $0x58] sm:$0xff]
          %v1004 = vld [vmem:[#allocation3 + $0x60] sm:$0xff]
          %v1005 = vld [vmem:[#allocation3 + $0x68] sm:$0xff]
          %v1006 = vld [vmem:[#allocation3 + $0x70] sm:$0xff]
          %v1007 = vld [vmem:[#allocation3 + $0x78] sm:$0xff]
          %v1008 = vld [vmem:[#allocation3 + $0x80] sm:$0xff]
          %v1009 = vld [vmem:[#allocation3 + $0x88] sm:$0xff]
          %v1010 = vld [vmem:[#allocation3 + $0x90] sm:$0xff]
          %v1011 = vld [vmem:[#allocation3 + $0x98] sm:$0xff]
          %v1012 = vld [vmem:[#allocation3 + $0xa0] sm:$0xff]
          %v1013 = vld [vmem:[#allocation3 + $0xa8] sm:$0xff]
          %v1014 = vld [vmem:[#allocation3 + $0xb0] sm:$0xff]
          %v1015 = vld [vmem:[#allocation3 + $0xb8] sm:$0xff]
          %v1016 = vld [vmem:[#allocation3 + $0xc0] sm:$0xff]
          %v1017 = vld [vmem:[#allocation3 + $0xc8] sm:$0xff]
          %v1018 = vld [vmem:[#allocation3 + $0xd0] sm:$0xff]
          %v1019 = vld [vmem:[#allocation3 + $0xd8] sm:$0xff]
          %v1020 = vld [vmem:[#allocation3 + $0xe0] sm:$0xff]
          %v1021 = vld [vmem:[#allocation3 + $0xe8] sm:$0xff]
          %v1022 = vld [vmem:[#allocation3 + $0xf0] sm:$0xff]
          %v1023 = vld [vmem:[#allocation3 + $0xf8] sm:$0xff]
          %v1024 = vadd.f32 %v960, %v992
          %v1025 = vadd.f32 %v961, %v993
          %v1026 = vadd.f32 %v962, %v994
          %v1027 = vadd.f32 %v963, %v995
          %v1028 = vadd.f32 %v964, %v996
          %v1029 = vadd.f32 %v965, %v997
          %v1030 = vadd.f32 %v966, %v998
          %v1031 = vadd.f32 %v967, %v999
          %v1032 = vadd.f32 %v968, %v1000
          %v1033 = vadd.f32 %v969, %v1001
          %v1034 = vadd.f32 %v970, %v1002
          %v1035 = vadd.f32 %v971, %v1003
          %v1036 = vadd.f32 %v972, %v1004
          %v1037 = vadd.f32 %v973, %v1005
          %v1038 = vadd.f32 %v974, %v1006
          %v1039 = vadd.f32 %v975, %v1007
          %v1040 = vadd.f32 %v976, %v1008
          %v1041 = vadd.f32 %v977, %v1009
          %v1042 = vadd.f32 %v978, %v1010
          %v1043 = vadd.f32 %v979, %v1011
          %v1044 = vadd.f32 %v980, %v1012
          %v1045 = vadd.f32 %v981, %v1013
          %v1046 = vadd.f32 %v982, %v1014
          %v1047 = vadd.f32 %v983, %v1015
          %v1048 = vadd.f32 %v984, %v1016
          %v1049 = vadd.f32 %v985, %v1017
          %v1050 = vadd.f32 %v986, %v1018
          %v1051 = vadd.f32 %v987, %v1019
          %v1052 = vadd.f32 %v988, %v1020
          %v1053 = vadd.f32 %v989, %v1021
          %v1054 = vadd.f32 %v990, %v1022
          %v1055 = vadd.f32 %v991, %v1023
          %s1056 = smul.u32 %s27, 128
          %s1057 = scalar_lea.vmem [#allocation10], %s1056
          %v1058 = vld [vmem:[%s1057] sm:$0xff]
          %v1059 = vld [vmem:[%s1057 + $0x8] sm:$0xff]
          %v1060 = vld [vmem:[%s1057 + $0x10] sm:$0xff]
          %v1061 = vld [vmem:[%s1057 + $0x18] sm:$0xff]
          %v1062 = vld [vmem:[%s1057 + $0x20] sm:$0xff]
          %v1063 = vld [vmem:[%s1057 + $0x28] sm:$0xff]
          %v1064 = vld [vmem:[%s1057 + $0x30] sm:$0xff]
          %v1065 = vld [vmem:[%s1057 + $0x38] sm:$0xff]
          %v1066 = vld [vmem:[%s1057 + $0x40] sm:$0xff]
          %v1067 = vld [vmem:[%s1057 + $0x48] sm:$0xff]
          %v1068 = vld [vmem:[%s1057 + $0x50] sm:$0xff]
          %v1069 = vld [vmem:[%s1057 + $0x58] sm:$0xff]
          %v1070 = vld [vmem:[%s1057 + $0x60] sm:$0xff]
          %v1071 = vld [vmem:[%s1057 + $0x68] sm:$0xff]
          %v1072 = vld [vmem:[%s1057 + $0x70] sm:$0xff]
          %v1073 = vld [vmem:[%s1057 + $0x78] sm:$0xff]
          %s1074 = scalar_lea.vmem %s4, %s27
          %v1075 = vld [vmem:[%s1074] sm:$0x1]
          %v1077 = vlaneseq
          %v1078 = vshrl.u32 %v1077, 7
          %v1079 = vsub.s32 0, %v1078
          %v1080 = vrot.slane %v1075, %v1079
          %1082 = vmatprep.subr.mxu0 0.0
          %1083 = vmatpush1.msra.mxu0 %v1073
          %1084 = vmatprep.subr.mxu0 0.0
          %1085 = vmatpush1.msra.mxu0 %v1072
          %1086 = vmatprep.subr.mxu0 0.0
          %1087 = vmatpush1.msra.mxu0 %v1071
          %1088 = vmatprep.subr.mxu0 0.0
          %1089 = vmatpush1.msra.mxu0 %v1070
          %1090 = vmatprep.subr.mxu0 0.0
          %1091 = vmatpush1.msra.mxu0 %v1069
          %1092 = vmatprep.subr.mxu0 0.0
          %1093 = vmatpush1.msra.mxu0 %v1068
          %1094 = vmatprep.subr.mxu0 0.0
          %1095 = vmatpush1.msra.mxu0 %v1067
          %1096 = vmatprep.subr.mxu0 0.0
          %1097 = vmatpush1.msra.mxu0 %v1066
          %1098 = vmatprep.subr.mxu0 0.0
          %1099 = vmatpush1.msra.mxu0 %v1065
          %1100 = vmatprep.subr.mxu0 0.0
          %1101 = vmatpush1.msra.mxu0 %v1064
          %1102 = vmatprep.subr.mxu0 0.0
          %1103 = vmatpush1.msra.mxu0 %v1063
          %1104 = vmatprep.subr.mxu0 0.0
          %1105 = vmatpush1.msra.mxu0 %v1062
          %1106 = vmatprep.subr.mxu0 0.0
          %1107 = vmatpush1.msra.mxu0 %v1061
          %1108 = vmatprep.subr.mxu0 0.0
          %1109 = vmatpush1.msra.mxu0 %v1060
          %1110 = vmatprep.subr.mxu0 0.0
          %1111 = vmatpush1.msra.mxu0 %v1059
          %1112 = vmatprep.subr.mxu0 0.0
          %1113 = vmatpush1.msra.mxu0 %v1058
          %1114 = vmatprep.subr.mxu0 0.0
          %1115 = vmatpush2.msra.mxu0 0.0
          %1116 = vmatprep.subr.mxu0 0.0
          %1117 = vmatpush2.msra.mxu0 0.0
          %1118 = vmatprep.subr.mxu0 0.0
          %1119 = vmatpush2.msra.mxu0 0.0
          %1120 = vmatprep.subr.mxu0 0.0
          %1121 = vmatpush2.msra.mxu0 0.0
          %1122 = vmatprep.subr.mxu0 0.0
          %1123 = vmatpush2.msra.mxu0 0.0
          %1124 = vmatprep.subr.mxu0 0.0
          %1125 = vmatpush2.msra.mxu0 0.0
          %1126 = vmatprep.subr.mxu0 0.0
          %1127 = vmatpush2.msra.mxu0 0.0
          %1128 = vmatprep.subr.mxu0 0.0
          %1129 = vmatpush2.msra.mxu0 0.0
          %1130 = vmatprep.subr.mxu0 0.0
          %1131 = vmatpush2.msra.mxu0 0.0
          %1132 = vmatprep.subr.mxu0 0.0
          %1133 = vmatpush2.msra.mxu0 0.0
          %1134 = vmatprep.subr.mxu0 0.0
          %1135 = vmatpush2.msra.mxu0 0.0
          %1136 = vmatprep.subr.mxu0 0.0
          %1137 = vmatpush2.msra.mxu0 0.0
          %1138 = vmatprep.subr.mxu0 0.0
          %1139 = vmatpush2.msra.mxu0 0.0
          %1140 = vmatprep.subr.mxu0 0.0
          %1141 = vmatpush2.msra.mxu0 0.0
          %1142 = vmatprep.subr.mxu0 0.0
          %1143 = vmatpush2.msra.mxu0 0.0
          %1144 = vmatprep.subr.mxu0 0.0
          %1145 = vmatpush2.msra.mxu0 0.0
          %1146 = vmatprep.mubr.f32.mxu0 0.0
          %1147 = vmatmul.mubr.f32.gmra.mxu0 %v1024
          %v1148 = vpop.f32.mrf.mxu0
          %v1149 = vadd.f32 %v1080, %v1148
          %v1150 = vpop.f32.mrf.mxu0
          %1151 = vmatprep.mubr.f32.mxu0 0.0
          %1152 = vmatmul.mubr.f32.gmra.mxu0 %v1025
          %v1153 = vpop.f32.mrf.mxu0
          %v1154 = vadd.f32 %v1080, %v1153
          %v1155 = vpop.f32.mrf.mxu0
          %1156 = vmatprep.mubr.f32.mxu0 0.0
          %1157 = vmatmul.mubr.f32.gmra.mxu0 %v1026
          %v1158 = vpop.f32.mrf.mxu0
          %v1159 = vadd.f32 %v1080, %v1158
          %v1160 = vpop.f32.mrf.mxu0
          %1161 = vmatprep.mubr.f32.mxu0 0.0
          %1162 = vmatmul.mubr.f32.gmra.mxu0 %v1027
          %v1163 = vpop.f32.mrf.mxu0
          %v1164 = vadd.f32 %v1080, %v1163
          %v1165 = vpop.f32.mrf.mxu0
          %1166 = vmatprep.mubr.f32.mxu0 0.0
          %1167 = vmatmul.mubr.f32.gmra.mxu0 %v1028
          %v1168 = vpop.f32.mrf.mxu0
          %v1169 = vadd.f32 %v1080, %v1168
          %v1170 = vpop.f32.mrf.mxu0
          %1171 = vmatprep.mubr.f32.mxu0 0.0
          %1172 = vmatmul.mubr.f32.gmra.mxu0 %v1029
          %v1173 = vpop.f32.mrf.mxu0
          %v1174 = vadd.f32 %v1080, %v1173
          %v1175 = vpop.f32.mrf.mxu0
          %1176 = vmatprep.mubr.f32.mxu0 0.0
          %1177 = vmatmul.mubr.f32.gmra.mxu0 %v1030
          %v1178 = vpop.f32.mrf.mxu0
          %v1179 = vadd.f32 %v1080, %v1178
          %v1180 = vpop.f32.mrf.mxu0
          %1181 = vmatprep.mubr.f32.mxu0 0.0
          %1182 = vmatmul.mubr.f32.gmra.mxu0 %v1031
          %v1183 = vpop.f32.mrf.mxu0
          %v1184 = vadd.f32 %v1080, %v1183
          %v1185 = vpop.f32.mrf.mxu0
          %1186 = vmatprep.mubr.f32.mxu0 0.0
          %1187 = vmatmul.mubr.f32.gmra.mxu0 %v1032
          %v1188 = vpop.f32.mrf.mxu0
          %v1189 = vadd.f32 %v1080, %v1188
          %v1190 = vpop.f32.mrf.mxu0
          %1191 = vmatprep.mubr.f32.mxu0 0.0
          %1192 = vmatmul.mubr.f32.gmra.mxu0 %v1033
          %v1193 = vpop.f32.mrf.mxu0
          %v1194 = vadd.f32 %v1080, %v1193
          %v1195 = vpop.f32.mrf.mxu0
          %1196 = vmatprep.mubr.f32.mxu0 0.0
          %1197 = vmatmul.mubr.f32.gmra.mxu0 %v1034
          %v1198 = vpop.f32.mrf.mxu0
          %v1199 = vadd.f32 %v1080, %v1198
          %v1200 = vpop.f32.mrf.mxu0
          %1201 = vmatprep.mubr.f32.mxu0 0.0
          %1202 = vmatmul.mubr.f32.gmra.mxu0 %v1035
          %v1203 = vpop.f32.mrf.mxu0
          %v1204 = vadd.f32 %v1080, %v1203
          %v1205 = vpop.f32.mrf.mxu0
          %1206 = vmatprep.mubr.f32.mxu0 0.0
          %1207 = vmatmul.mubr.f32.gmra.mxu0 %v1036
          %v1208 = vpop.f32.mrf.mxu0
          %v1209 = vadd.f32 %v1080, %v1208
          %v1210 = vpop.f32.mrf.mxu0
          %1211 = vmatprep.mubr.f32.mxu0 0.0
          %1212 = vmatmul.mubr.f32.gmra.mxu0 %v1037
          %v1213 = vpop.f32.mrf.mxu0
          %v1214 = vadd.f32 %v1080, %v1213
          %v1215 = vpop.f32.mrf.mxu0
          %1216 = vmatprep.mubr.f32.mxu0 0.0
          %1217 = vmatmul.mubr.f32.gmra.mxu0 %v1038
          %v1218 = vpop.f32.mrf.mxu0
          %v1219 = vadd.f32 %v1080, %v1218
          %v1220 = vpop.f32.mrf.mxu0
          %1221 = vmatprep.mubr.f32.mxu0 0.0
          %1222 = vmatmul.mubr.f32.gmra.mxu0 %v1039
          %v1223 = vpop.f32.mrf.mxu0
          %v1224 = vadd.f32 %v1080, %v1223
          %v1225 = vpop.f32.mrf.mxu0
          %1226 = vmatprep.mubr.f32.mxu0 0.0
          %1227 = vmatmul.mubr.f32.gmra.mxu0 %v1040
          %v1228 = vpop.f32.mrf.mxu0
          %v1229 = vadd.f32 %v1080, %v1228
          %v1230 = vpop.f32.mrf.mxu0
          %1231 = vmatprep.mubr.f32.mxu0 0.0
          %1232 = vmatmul.mubr.f32.gmra.mxu0 %v1041
          %v1233 = vpop.f32.mrf.mxu0
          %v1234 = vadd.f32 %v1080, %v1233
          %v1235 = vpop.f32.mrf.mxu0
          %1236 = vmatprep.mubr.f32.mxu0 0.0
          %1237 = vmatmul.mubr.f32.gmra.mxu0 %v1042
          %v1238 = vpop.f32.mrf.mxu0
          %v1239 = vadd.f32 %v1080, %v1238
          %v1240 = vpop.f32.mrf.mxu0
          %1241 = vmatprep.mubr.f32.mxu0 0.0
          %1242 = vmatmul.mubr.f32.gmra.mxu0 %v1043
          %v1243 = vpop.f32.mrf.mxu0
          %v1244 = vadd.f32 %v1080, %v1243
          %v1245 = vpop.f32.mrf.mxu0
          %1246 = vmatprep.mubr.f32.mxu0 0.0
          %1247 = vmatmul.mubr.f32.gmra.mxu0 %v1044
          %v1248 = vpop.f32.mrf.mxu0
          %v1249 = vadd.f32 %v1080, %v1248
          %v1250 = vpop.f32.mrf.mxu0
          %1251 = vmatprep.mubr.f32.mxu0 0.0
          %1252 = vmatmul.mubr.f32.gmra.mxu0 %v1045
          %v1253 = vpop.f32.mrf.mxu0
          %v1254 = vadd.f32 %v1080, %v1253
          %v1255 = vpop.f32.mrf.mxu0
          %1256 = vmatprep.mubr.f32.mxu0 0.0
          %1257 = vmatmul.mubr.f32.gmra.mxu0 %v1046
          %v1258 = vpop.f32.mrf.mxu0
          %v1259 = vadd.f32 %v1080, %v1258
          %v1260 = vpop.f32.mrf.mxu0
          %1261 = vmatprep.mubr.f32.mxu0 0.0
          %1262 = vmatmul.mubr.f32.gmra.mxu0 %v1047
          %v1263 = vpop.f32.mrf.mxu0
          %v1264 = vadd.f32 %v1080, %v1263
          %v1265 = vpop.f32.mrf.mxu0
          %1266 = vmatprep.mubr.f32.mxu0 0.0
          %1267 = vmatmul.mubr.f32.gmra.mxu0 %v1048
          %v1268 = vpop.f32.mrf.mxu0
          %v1269 = vadd.f32 %v1080, %v1268
          %v1270 = vpop.f32.mrf.mxu0
          %1271 = vmatprep.mubr.f32.mxu0 0.0
          %1272 = vmatmul.mubr.f32.gmra.mxu0 %v1049
          %v1273 = vpop.f32.mrf.mxu0
          %v1274 = vadd.f32 %v1080, %v1273
          %v1275 = vpop.f32.mrf.mxu0
          %1276 = vmatprep.mubr.f32.mxu0 0.0
          %1277 = vmatmul.mubr.f32.gmra.mxu0 %v1050
          %v1278 = vpop.f32.mrf.mxu0
          %v1279 = vadd.f32 %v1080, %v1278
          %v1280 = vpop.f32.mrf.mxu0
          %1281 = vmatprep.mubr.f32.mxu0 0.0
          %1282 = vmatmul.mubr.f32.gmra.mxu0 %v1051
          %v1283 = vpop.f32.mrf.mxu0
          %v1284 = vadd.f32 %v1080, %v1283
          %v1285 = vpop.f32.mrf.mxu0
          %1286 = vmatprep.mubr.f32.mxu0 0.0
          %1287 = vmatmul.mubr.f32.gmra.mxu0 %v1052
          %v1288 = vpop.f32.mrf.mxu0
          %v1289 = vadd.f32 %v1080, %v1288
          %v1290 = vpop.f32.mrf.mxu0
          %1291 = vmatprep.mubr.f32.mxu0 0.0
          %1292 = vmatmul.mubr.f32.gmra.mxu0 %v1053
          %v1293 = vpop.f32.mrf.mxu0
          %v1294 = vadd.f32 %v1080, %v1293
          %v1295 = vpop.f32.mrf.mxu0
          %1296 = vmatprep.mubr.f32.mxu0 0.0
          %1297 = vmatmul.mubr.f32.gmra.mxu0 %v1054
          %v1298 = vpop.f32.mrf.mxu0
          %v1299 = vadd.f32 %v1080, %v1298
          %v1300 = vpop.f32.mrf.mxu0
          %1301 = vmatprep.mubr.f32.mxu0 0.0
          %1302 = vmatmul.mubr.f32.gmra.mxu0 %v1055
          %v1303 = vpop.f32.mrf.mxu0
          %v1304 = vadd.f32 %v1080, %v1303
          %v1305 = vpop.f32.mrf.mxu0
          %1306 = vdwg.mxu0
          %v1307 = vmax.f32 %v1149, 0.0
          %v1308 = vmax.f32 %v1154, 0.0
          %v1309 = vmax.f32 %v1159, 0.0
          %v1310 = vmax.f32 %v1164, 0.0
          %v1311 = vmax.f32 %v1169, 0.0
          %v1312 = vmax.f32 %v1174, 0.0
          %v1313 = vmax.f32 %v1179, 0.0
          %v1314 = vmax.f32 %v1184, 0.0
          %v1315 = vmax.f32 %v1189, 0.0
          %v1316 = vmax.f32 %v1194, 0.0
          %v1317 = vmax.f32 %v1199, 0.0
          %v1318 = vmax.f32 %v1204, 0.0
          %v1319 = vmax.f32 %v1209, 0.0
          %v1320 = vmax.f32 %v1214, 0.0
          %v1321 = vmax.f32 %v1219, 0.0
          %v1322 = vmax.f32 %v1224, 0.0
          %v1323 = vmax.f32 %v1229, 0.0
          %v1324 = vmax.f32 %v1234, 0.0
          %v1325 = vmax.f32 %v1239, 0.0
          %v1326 = vmax.f32 %v1244, 0.0
          %v1327 = vmax.f32 %v1249, 0.0
          %v1328 = vmax.f32 %v1254, 0.0
          %v1329 = vmax.f32 %v1259, 0.0
          %v1330 = vmax.f32 %v1264, 0.0
          %v1331 = vmax.f32 %v1269, 0.0
          %v1332 = vmax.f32 %v1274, 0.0
          %v1333 = vmax.f32 %v1279, 0.0
          %v1334 = vmax.f32 %v1284, 0.0
          %v1335 = vmax.f32 %v1289, 0.0
          %v1336 = vmax.f32 %v1294, 0.0
          %v1337 = vmax.f32 %v1299, 0.0
          %v1338 = vmax.f32 %v1304, 0.0
          %s1339 = scalar_lea.vmem [#allocation12], %s1056
          %v1340 = vld [vmem:[%s1339] sm:$0xff]
          %v1341 = vld [vmem:[%s1339 + $0x8] sm:$0xff]
          %v1342 = vld [vmem:[%s1339 + $0x10] sm:$0xff]
          %v1343 = vld [vmem:[%s1339 + $0x18] sm:$0xff]
          %v1344 = vld [vmem:[%s1339 + $0x20] sm:$0xff]
          %v1345 = vld [vmem:[%s1339 + $0x28] sm:$0xff]
          %v1346 = vld [vmem:[%s1339 + $0x30] sm:$0xff]
          %v1347 = vld [vmem:[%s1339 + $0x38] sm:$0xff]
          %v1348 = vld [vmem:[%s1339 + $0x40] sm:$0xff]
          %v1349 = vld [vmem:[%s1339 + $0x48] sm:$0xff]
          %v1350 = vld [vmem:[%s1339 + $0x50] sm:$0xff]
          %v1351 = vld [vmem:[%s1339 + $0x58] sm:$0xff]
          %v1352 = vld [vmem:[%s1339 + $0x60] sm:$0xff]
          %v1353 = vld [vmem:[%s1339 + $0x68] sm:$0xff]
          %v1354 = vld [vmem:[%s1339 + $0x70] sm:$0xff]
          %v1355 = vld [vmem:[%s1339 + $0x78] sm:$0xff]
          %s1356 = scalar_lea.vmem %s6, %s27
          %v1357 = vld [vmem:[%s1356] sm:$0x1]
          %v1359 = vlaneseq
          %v1360 = vshrl.u32 %v1359, 7
          %v1361 = vsub.s32 0, %v1360
          %v1362 = vrot.slane %v1357, %v1361
          %1364 = vmatprep.subr.mxu0 0.0
          %1365 = vmatpush1.msra.mxu0 %v1355
          %1366 = vmatprep.subr.mxu0 0.0
          %1367 = vmatpush1.msra.mxu0 %v1354
          %1368 = vmatprep.subr.mxu0 0.0
          %1369 = vmatpush1.msra.mxu0 %v1353
          %1370 = vmatprep.subr.mxu0 0.0
          %1371 = vmatpush1.msra.mxu0 %v1352
          %1372 = vmatprep.subr.mxu0 0.0
          %1373 = vmatpush1.msra.mxu0 %v1351
          %1374 = vmatprep.subr.mxu0 0.0
          %1375 = vmatpush1.msra.mxu0 %v1350
          %1376 = vmatprep.subr.mxu0 0.0
          %1377 = vmatpush1.msra.mxu0 %v1349
          %1378 = vmatprep.subr.mxu0 0.0
          %1379 = vmatpush1.msra.mxu0 %v1348
          %1380 = vmatprep.subr.mxu0 0.0
          %1381 = vmatpush1.msra.mxu0 %v1347
          %1382 = vmatprep.subr.mxu0 0.0
          %1383 = vmatpush1.msra.mxu0 %v1346
          %1384 = vmatprep.subr.mxu0 0.0
          %1385 = vmatpush1.msra.mxu0 %v1345
          %1386 = vmatprep.subr.mxu0 0.0
          %1387 = vmatpush1.msra.mxu0 %v1344
          %1388 = vmatprep.subr.mxu0 0.0
          %1389 = vmatpush1.msra.mxu0 %v1343
          %1390 = vmatprep.subr.mxu0 0.0
          %1391 = vmatpush1.msra.mxu0 %v1342
          %1392 = vmatprep.subr.mxu0 0.0
          %1393 = vmatpush1.msra.mxu0 %v1341
          %1394 = vmatprep.subr.mxu0 0.0
          %1395 = vmatpush1.msra.mxu0 %v1340
          %1396 = vmatprep.subr.mxu0 0.0
          %1397 = vmatpush2.msra.mxu0 0.0
          %1398 = vmatprep.subr.mxu0 0.0
          %1399 = vmatpush2.msra.mxu0 0.0
          %1400 = vmatprep.subr.mxu0 0.0
          %1401 = vmatpush2.msra.mxu0 0.0
          %1402 = vmatprep.subr.mxu0 0.0
          %1403 = vmatpush2.msra.mxu0 0.0
          %1404 = vmatprep.subr.mxu0 0.0
          %1405 = vmatpush2.msra.mxu0 0.0
          %1406 = vmatprep.subr.mxu0 0.0
          %1407 = vmatpush2.msra.mxu0 0.0
          %1408 = vmatprep.subr.mxu0 0.0
          %1409 = vmatpush2.msra.mxu0 0.0
          %1410 = vmatprep.subr.mxu0 0.0
          %1411 = vmatpush2.msra.mxu0 0.0
          %1412 = vmatprep.subr.mxu0 0.0
          %1413 = vmatpush2.msra.mxu0 0.0
          %1414 = vmatprep.subr.mxu0 0.0
          %1415 = vmatpush2.msra.mxu0 0.0
          %1416 = vmatprep.subr.mxu0 0.0
          %1417 = vmatpush2.msra.mxu0 0.0
          %1418 = vmatprep.subr.mxu0 0.0
          %1419 = vmatpush2.msra.mxu0 0.0
          %1420 = vmatprep.subr.mxu0 0.0
          %1421 = vmatpush2.msra.mxu0 0.0
          %1422 = vmatprep.subr.mxu0 0.0
          %1423 = vmatpush2.msra.mxu0 0.0
          %1424 = vmatprep.subr.mxu0 0.0
          %1425 = vmatpush2.msra.mxu0 0.0
          %1426 = vmatprep.subr.mxu0 0.0
          %1427 = vmatpush2.msra.mxu0 0.0
          %1428 = vmatprep.mubr.f32.mxu0 0.0
          %1429 = vmatmul.mubr.f32.gmra.mxu0 %v1307
          %v1430 = vpop.f32.mrf.mxu0
          %v1431 = vadd.f32 %v1362, %v1430
          %v1432 = vpop.f32.mrf.mxu0
          %1433 = vmatprep.mubr.f32.mxu0 0.0
          %1434 = vmatmul.mubr.f32.gmra.mxu0 %v1308
          %v1435 = vpop.f32.mrf.mxu0
          %v1436 = vadd.f32 %v1362, %v1435
          %v1437 = vpop.f32.mrf.mxu0
          %1438 = vmatprep.mubr.f32.mxu0 0.0
          %1439 = vmatmul.mubr.f32.gmra.mxu0 %v1309
          %v1440 = vpop.f32.mrf.mxu0
          %v1441 = vadd.f32 %v1362, %v1440
          %v1442 = vpop.f32.mrf.mxu0
          %1443 = vmatprep.mubr.f32.mxu0 0.0
          %1444 = vmatmul.mubr.f32.gmra.mxu0 %v1310
          %v1445 = vpop.f32.mrf.mxu0
          %v1446 = vadd.f32 %v1362, %v1445
          %v1447 = vpop.f32.mrf.mxu0
          %1448 = vmatprep.mubr.f32.mxu0 0.0
          %1449 = vmatmul.mubr.f32.gmra.mxu0 %v1311
          %v1450 = vpop.f32.mrf.mxu0
          %v1451 = vadd.f32 %v1362, %v1450
          %v1452 = vpop.f32.mrf.mxu0
          %1453 = vmatprep.mubr.f32.mxu0 0.0
          %1454 = vmatmul.mubr.f32.gmra.mxu0 %v1312
          %v1455 = vpop.f32.mrf.mxu0
          %v1456 = vadd.f32 %v1362, %v1455
          %v1457 = vpop.f32.mrf.mxu0
          %1458 = vmatprep.mubr.f32.mxu0 0.0
          %1459 = vmatmul.mubr.f32.gmra.mxu0 %v1313
          %v1460 = vpop.f32.mrf.mxu0
          %v1461 = vadd.f32 %v1362, %v1460
          %v1462 = vpop.f32.mrf.mxu0
          %1463 = vmatprep.mubr.f32.mxu0 0.0
          %1464 = vmatmul.mubr.f32.gmra.mxu0 %v1314
          %v1465 = vpop.f32.mrf.mxu0
          %v1466 = vadd.f32 %v1362, %v1465
          %v1467 = vpop.f32.mrf.mxu0
          %1468 = vmatprep.mubr.f32.mxu0 0.0
          %1469 = vmatmul.mubr.f32.gmra.mxu0 %v1315
          %v1470 = vpop.f32.mrf.mxu0
          %v1471 = vadd.f32 %v1362, %v1470
          %v1472 = vpop.f32.mrf.mxu0
          %1473 = vmatprep.mubr.f32.mxu0 0.0
          %1474 = vmatmul.mubr.f32.gmra.mxu0 %v1316
          %v1475 = vpop.f32.mrf.mxu0
          %v1476 = vadd.f32 %v1362, %v1475
          %v1477 = vpop.f32.mrf.mxu0
          %1478 = vmatprep.mubr.f32.mxu0 0.0
          %1479 = vmatmul.mubr.f32.gmra.mxu0 %v1317
          %v1480 = vpop.f32.mrf.mxu0
          %v1481 = vadd.f32 %v1362, %v1480
          %v1482 = vpop.f32.mrf.mxu0
          %1483 = vmatprep.mubr.f32.mxu0 0.0
          %1484 = vmatmul.mubr.f32.gmra.mxu0 %v1318
          %v1485 = vpop.f32.mrf.mxu0
          %v1486 = vadd.f32 %v1362, %v1485
          %v1487 = vpop.f32.mrf.mxu0
          %1488 = vmatprep.mubr.f32.mxu0 0.0
          %1489 = vmatmul.mubr.f32.gmra.mxu0 %v1319
          %v1490 = vpop.f32.mrf.mxu0
          %v1491 = vadd.f32 %v1362, %v1490
          %v1492 = vpop.f32.mrf.mxu0
          %1493 = vmatprep.mubr.f32.mxu0 0.0
          %1494 = vmatmul.mubr.f32.gmra.mxu0 %v1320
          %v1495 = vpop.f32.mrf.mxu0
          %v1496 = vadd.f32 %v1362, %v1495
          %v1497 = vpop.f32.mrf.mxu0
          %1498 = vmatprep.mubr.f32.mxu0 0.0
          %1499 = vmatmul.mubr.f32.gmra.mxu0 %v1321
          %v1500 = vpop.f32.mrf.mxu0
          %v1501 = vadd.f32 %v1362, %v1500
          %v1502 = vpop.f32.mrf.mxu0
          %1503 = vmatprep.mubr.f32.mxu0 0.0
          %1504 = vmatmul.mubr.f32.gmra.mxu0 %v1322
          %v1505 = vpop.f32.mrf.mxu0
          %v1506 = vadd.f32 %v1362, %v1505
          %v1507 = vpop.f32.mrf.mxu0
          %1508 = vmatprep.mubr.f32.mxu0 0.0
          %1509 = vmatmul.mubr.f32.gmra.mxu0 %v1323
          %v1510 = vpop.f32.mrf.mxu0
          %v1511 = vadd.f32 %v1362, %v1510
          %v1512 = vpop.f32.mrf.mxu0
          %1513 = vmatprep.mubr.f32.mxu0 0.0
          %1514 = vmatmul.mubr.f32.gmra.mxu0 %v1324
          %v1515 = vpop.f32.mrf.mxu0
          %v1516 = vadd.f32 %v1362, %v1515
          %v1517 = vpop.f32.mrf.mxu0
          %1518 = vmatprep.mubr.f32.mxu0 0.0
          %1519 = vmatmul.mubr.f32.gmra.mxu0 %v1325
          %v1520 = vpop.f32.mrf.mxu0
          %v1521 = vadd.f32 %v1362, %v1520
          %v1522 = vpop.f32.mrf.mxu0
          %1523 = vmatprep.mubr.f32.mxu0 0.0
          %1524 = vmatmul.mubr.f32.gmra.mxu0 %v1326
          %v1525 = vpop.f32.mrf.mxu0
          %v1526 = vadd.f32 %v1362, %v1525
          %v1527 = vpop.f32.mrf.mxu0
          %1528 = vmatprep.mubr.f32.mxu0 0.0
          %1529 = vmatmul.mubr.f32.gmra.mxu0 %v1327
          %v1530 = vpop.f32.mrf.mxu0
          %v1531 = vadd.f32 %v1362, %v1530
          %v1532 = vpop.f32.mrf.mxu0
          %1533 = vmatprep.mubr.f32.mxu0 0.0
          %1534 = vmatmul.mubr.f32.gmra.mxu0 %v1328
          %v1535 = vpop.f32.mrf.mxu0
          %v1536 = vadd.f32 %v1362, %v1535
          %v1537 = vpop.f32.mrf.mxu0
          %1538 = vmatprep.mubr.f32.mxu0 0.0
          %1539 = vmatmul.mubr.f32.gmra.mxu0 %v1329
          %v1540 = vpop.f32.mrf.mxu0
          %v1541 = vadd.f32 %v1362, %v1540
          %v1542 = vpop.f32.mrf.mxu0
          %1543 = vmatprep.mubr.f32.mxu0 0.0
          %1544 = vmatmul.mubr.f32.gmra.mxu0 %v1330
          %v1545 = vpop.f32.mrf.mxu0
          %v1546 = vadd.f32 %v1362, %v1545
          %v1547 = vpop.f32.mrf.mxu0
          %1548 = vmatprep.mubr.f32.mxu0 0.0
          %1549 = vmatmul.mubr.f32.gmra.mxu0 %v1331
          %v1550 = vpop.f32.mrf.mxu0
          %v1551 = vadd.f32 %v1362, %v1550
          %v1552 = vpop.f32.mrf.mxu0
          %1553 = vmatprep.mubr.f32.mxu0 0.0
          %1554 = vmatmul.mubr.f32.gmra.mxu0 %v1332
          %v1555 = vpop.f32.mrf.mxu0
          %v1556 = vadd.f32 %v1362, %v1555
          %v1557 = vpop.f32.mrf.mxu0
          %1558 = vmatprep.mubr.f32.mxu0 0.0
          %1559 = vmatmul.mubr.f32.gmra.mxu0 %v1333
          %v1560 = vpop.f32.mrf.mxu0
          %v1561 = vadd.f32 %v1362, %v1560
          %v1562 = vpop.f32.mrf.mxu0
          %1563 = vmatprep.mubr.f32.mxu0 0.0
          %1564 = vmatmul.mubr.f32.gmra.mxu0 %v1334
          %v1565 = vpop.f32.mrf.mxu0
          %v1566 = vadd.f32 %v1362, %v1565
          %v1567 = vpop.f32.mrf.mxu0
          %1568 = vmatprep.mubr.f32.mxu0 0.0
          %1569 = vmatmul.mubr.f32.gmra.mxu0 %v1335
          %v1570 = vpop.f32.mrf.mxu0
          %v1571 = vadd.f32 %v1362, %v1570
          %v1572 = vpop.f32.mrf.mxu0
          %1573 = vmatprep.mubr.f32.mxu0 0.0
          %1574 = vmatmul.mubr.f32.gmra.mxu0 %v1336
          %v1575 = vpop.f32.mrf.mxu0
          %v1576 = vadd.f32 %v1362, %v1575
          %v1577 = vpop.f32.mrf.mxu0
          %1578 = vmatprep.mubr.f32.mxu0 0.0
          %1579 = vmatmul.mubr.f32.gmra.mxu0 %v1337
          %v1580 = vpop.f32.mrf.mxu0
          %v1581 = vadd.f32 %v1362, %v1580
          %v1582 = vpop.f32.mrf.mxu0
          %1583 = vmatprep.mubr.f32.mxu0 0.0
          %1584 = vmatmul.mubr.f32.gmra.mxu0 %v1338
          %v1585 = vpop.f32.mrf.mxu0
          %v1586 = vadd.f32 %v1362, %v1585
          %v1587 = vpop.f32.mrf.mxu0
          %1588 = vdwg.mxu0
          %v1589 = vmax.f32 %v1431, 0.0
          %v1590 = vmax.f32 %v1436, 0.0
          %v1591 = vmax.f32 %v1441, 0.0
          %v1592 = vmax.f32 %v1446, 0.0
          %v1593 = vmax.f32 %v1451, 0.0
          %v1594 = vmax.f32 %v1456, 0.0
          %v1595 = vmax.f32 %v1461, 0.0
          %v1596 = vmax.f32 %v1466, 0.0
          %v1597 = vmax.f32 %v1471, 0.0
          %v1598 = vmax.f32 %v1476, 0.0
          %v1599 = vmax.f32 %v1481, 0.0
          %v1600 = vmax.f32 %v1486, 0.0
          %v1601 = vmax.f32 %v1491, 0.0
          %v1602 = vmax.f32 %v1496, 0.0
          %v1603 = vmax.f32 %v1501, 0.0
          %v1604 = vmax.f32 %v1506, 0.0
          %v1605 = vmax.f32 %v1511, 0.0
          %v1606 = vmax.f32 %v1516, 0.0
          %v1607 = vmax.f32 %v1521, 0.0
          %v1608 = vmax.f32 %v1526, 0.0
          %v1609 = vmax.f32 %v1531, 0.0
          %v1610 = vmax.f32 %v1536, 0.0
          %v1611 = vmax.f32 %v1541, 0.0
          %v1612 = vmax.f32 %v1546, 0.0
          %v1613 = vmax.f32 %v1551, 0.0
          %v1614 = vmax.f32 %v1556, 0.0
          %v1615 = vmax.f32 %v1561, 0.0
          %v1616 = vmax.f32 %v1566, 0.0
          %v1617 = vmax.f32 %v1571, 0.0
          %v1618 = vmax.f32 %v1576, 0.0
          %v1619 = vmax.f32 %v1581, 0.0
          %v1620 = vmax.f32 %v1586, 0.0
          %s1621 = smul.u32 %s386, 256
          %s1622 = sadd.s32 %s923, %s1621
          %s1623 = scalar_lea.vmem [#allocation2], %s1622
          %1624 = vst [vmem:[%s1623] sm:$0xff] %v1589
          %1625 = vst [vmem:[%s1623 + $0x8] sm:$0xff] %v1590
          %1626 = vst [vmem:[%s1623 + $0x10] sm:$0xff] %v1591
          %1627 = vst [vmem:[%s1623 + $0x18] sm:$0xff] %v1592
          %1628 = vst [vmem:[%s1623 + $0x20] sm:$0xff] %v1593
          %1629 = vst [vmem:[%s1623 + $0x28] sm:$0xff] %v1594
          %1630 = vst [vmem:[%s1623 + $0x30] sm:$0xff] %v1595
          %1631 = vst [vmem:[%s1623 + $0x38] sm:$0xff] %v1596
          %1632 = vst [vmem:[%s1623 + $0x40] sm:$0xff] %v1597
          %1633 = vst [vmem:[%s1623 + $0x48] sm:$0xff] %v1598
          %1634 = vst [vmem:[%s1623 + $0x50] sm:$0xff] %v1599
          %1635 = vst [vmem:[%s1623 + $0x58] sm:$0xff] %v1600
          %1636 = vst [vmem:[%s1623 + $0x60] sm:$0xff] %v1601
          %1637 = vst [vmem:[%s1623 + $0x68] sm:$0xff] %v1602
          %1638 = vst [vmem:[%s1623 + $0x70] sm:$0xff] %v1603
          %1639 = vst [vmem:[%s1623 + $0x78] sm:$0xff] %v1604
          %1640 = vst [vmem:[%s1623 + $0x80] sm:$0xff] %v1605
          %1641 = vst [vmem:[%s1623 + $0x88] sm:$0xff] %v1606
          %1642 = vst [vmem:[%s1623 + $0x90] sm:$0xff] %v1607
          %1643 = vst [vmem:[%s1623 + $0x98] sm:$0xff] %v1608
          %1644 = vst [vmem:[%s1623 + $0xa0] sm:$0xff] %v1609
          %1645 = vst [vmem:[%s1623 + $0xa8] sm:$0xff] %v1610
          %1646 = vst [vmem:[%s1623 + $0xb0] sm:$0xff] %v1611
          %1647 = vst [vmem:[%s1623 + $0xb8] sm:$0xff] %v1612
          %1648 = vst [vmem:[%s1623 + $0xc0] sm:$0xff] %v1613
          %1649 = vst [vmem:[%s1623 + $0xc8] sm:$0xff] %v1614
          %1650 = vst [vmem:[%s1623 + $0xd0] sm:$0xff] %v1615
          %1651 = vst [vmem:[%s1623 + $0xd8] sm:$0xff] %v1616
          %1652 = vst [vmem:[%s1623 + $0xe0] sm:$0xff] %v1617
          %1653 = vst [vmem:[%s1623 + $0xe8] sm:$0xff] %v1618
          %1654 = vst [vmem:[%s1623 + $0xf0] sm:$0xff] %v1619
          %1655 = vst [vmem:[%s1623 + $0xf8] sm:$0xff] %v1620
          %1656 = vst [vmem:[#allocation13] sm:$0xff] %v1431
          %1657 = vst [vmem:[#allocation13 + $0x8] sm:$0xff] %v1436
          %1658 = vst [vmem:[#allocation13 + $0x10] sm:$0xff] %v1441
          %1659 = vst [vmem:[#allocation13 + $0x18] sm:$0xff] %v1446
          %1660 = vst [vmem:[#allocation13 + $0x20] sm:$0xff] %v1451
          %1661 = vst [vmem:[#allocation13 + $0x28] sm:$0xff] %v1456
          %1662 = vst [vmem:[#allocation13 + $0x30] sm:$0xff] %v1461
          %1663 = vst [vmem:[#allocation13 + $0x38] sm:$0xff] %v1466
          %1664 = vst [vmem:[#allocation13 + $0x40] sm:$0xff] %v1471
          %1665 = vst [vmem:[#allocation13 + $0x48] sm:$0xff] %v1476
          %1666 = vst [vmem:[#allocation13 + $0x50] sm:$0xff] %v1481
          %1667 = vst [vmem:[#allocation13 + $0x58] sm:$0xff] %v1486
          %1668 = vst [vmem:[#allocation13 + $0x60] sm:$0xff] %v1491
          %1669 = vst [vmem:[#allocation13 + $0x68] sm:$0xff] %v1496
          %1670 = vst [vmem:[#allocation13 + $0x70] sm:$0xff] %v1501
          %1671 = vst [vmem:[#allocation13 + $0x78] sm:$0xff] %v1506
          %1672 = vst [vmem:[#allocation13 + $0x80] sm:$0xff] %v1511
          %1673 = vst [vmem:[#allocation13 + $0x88] sm:$0xff] %v1516
          %1674 = vst [vmem:[#allocation13 + $0x90] sm:$0xff] %v1521
          %1675 = vst [vmem:[#allocation13 + $0x98] sm:$0xff] %v1526
          %1676 = vst [vmem:[#allocation13 + $0xa0] sm:$0xff] %v1531
          %1677 = vst [vmem:[#allocation13 + $0xa8] sm:$0xff] %v1536
          %1678 = vst [vmem:[#allocation13 + $0xb0] sm:$0xff] %v1541
          %1679 = vst [vmem:[#allocation13 + $0xb8] sm:$0xff] %v1546
          %1680 = vst [vmem:[#allocation13 + $0xc0] sm:$0xff] %v1551
          %1681 = vst [vmem:[#allocation13 + $0xc8] sm:$0xff] %v1556
          %1682 = vst [vmem:[#allocation13 + $0xd0] sm:$0xff] %v1561
          %1683 = vst [vmem:[#allocation13 + $0xd8] sm:$0xff] %v1566
          %1684 = vst [vmem:[#allocation13 + $0xe0] sm:$0xff] %v1571
          %1685 = vst [vmem:[#allocation13 + $0xe8] sm:$0xff] %v1576
          %1686 = vst [vmem:[#allocation13 + $0xf0] sm:$0xff] %v1581
          %1687 = vst [vmem:[#allocation13 + $0xf8] sm:$0xff] %v1586
        $region76: #{tpu_custom_call.1} parent=43 // pred_fallthru
          _
        // Predicated region
        $region77: #{tpu_custom_call.1} parent=43 // pred_check
          %p1688 = pneg %p192
        $region78: #{tpu_custom_call.1} parent=43 // pred_check_branch
          %1690 = sbr.rel (%p1688) target = $region80
        $region79: #{tpu_custom_call.1} parent=43 // pred_region
          %s1691 = smul.u32 32, %s28
          %s1693 = ssub.s32 4096, 4096
          %1694 = vsyncadd [#allocation7], %s1693
          %s1695 = smul.addr %s1691, 128
          %s1696 = scalar_lea.hbm %s7, %s1695
          %s1697 = sshll.u32 [#allocation13], 4
          %s1698 = int_to_ptr.vmem [resolvable:$true] %s1697
          %1703 = dma.vmem_to_hbm [thread:$0]  %s1698, 4096, %s1696, [#allocation7], 128, 128, 8
        $region80: #{tpu_custom_call.1} parent=43 // pred_fallthru
          _
        // Predicated region
        $region81: #{tpu_custom_call.1} parent=43 // pred_check
          %p1704 = pneg %p192
        $region82: #{tpu_custom_call.1} parent=43 // pred_check_branch
          %1706 = sbr.rel (%p1704) target = $region84
        $region83: #{tpu_custom_call.1} parent=43 // pred_region
          %1707 = dma.done [#allocation7], 4096
        $region84: #{tpu_custom_call.1} parent=43 // pred_fallthru
          _
      $region44: #{tpu_custom_call.1} parent=5 // pred_fallthru
        _
      %p1708 = scmp.le.s32.totalorder 2, %s17
      // Predicated region
      $region85: #{tpu_custom_call.1} parent=5 // pred_check
        %p1709 = pneg %p1708
      $region86: #{tpu_custom_call.1} parent=5 // pred_check_branch
        %1711 = sbr.rel (%p1709) target = $region88
      $region87: #{tpu_custom_call.1} parent=5 // pred_region
        %s1712 = ssub.s32 %s17, 2
      $region88: #{tpu_custom_call.1} parent=5 // pred_fallthru
        _
    $region6: #{tpu_custom_call.1} parent=1 // loop_footer
      %s21 = sadd.s32 1, %s17
    $region7: #{tpu_custom_call.1} parent=1 // loop_footer_branch
      %16 = sbr.rel target = $region3
    $region8: #{tpu_custom_call.1} parent=1 // loop_exit
      _
    %1713 = vsyncpa [#allocation6], 1
    %s1714 = scalar_lea.sflag [#allocation6], 1
    %1715 = vsyncpa %s1714, 1
    %1716 = vsyncpa [#allocation11], 1
    %1717 = vsyncpa [#allocation7], 1
    %s1718 = scalar_lea.sflag [#allocation7], 1
    %1719 = vsyncpa %s1718, 1
    %1720 = vsyncpa [#allocation8], 1
    %s1721 = scalar_lea.sflag [#allocation8], 1
    %1722 = vsyncpa %s1721, 1
  %1723 = vsyncmov [#allocation4]
  %s1724 = vpop.sfrf %1723
  %p1725 = scmp.eq.s32.totalorder %s1724, 0
  %p1726 = pneg %p1725
  %1728 = shalt.err (%p1726)

</llo_original>
